<compile_context>
chip_gen: v6e
topology: v6e:2x2x1
jax: 0.10.0
libtpu: 0.0.40
codegen_flags: <defaults>
</compile_context>

<pallas_src>
import functools

import jax
import jax.numpy as jnp
from jax.experimental import pallas as pl
from jax.experimental.pallas import tpu as pltpu

_LANE = 128


def _round_up(x, m):
    return (x + m - 1) // m * m


def _sigmoid(x):
    # 1 EUP push (tanh) instead of 2 (exp + reciprocal).
    return 0.5 * jnp.tanh(0.5 * x) + 0.5


def _pad_gate_cols(w, h, h_pad):
    """Pad each of the 4 gate blocks (width h, last axis) out to width h_pad."""
    if h_pad == h:
        return w
    parts = jnp.split(w, 4, axis=-1)
    pad = [(0, 0)] * (w.ndim - 1) + [(0, h_pad - h)]
    return jnp.concatenate([jnp.pad(p, pad) for p in parts], axis=-1)


def _pick_blocks(batch, seq_len, h_pad, itemsize, *, t_block=None, b_block=None,
                 vmem_budget=32 * 1024 * 1024):
    """VMEM-budgeted block sizes (sized to fit v7x's 64 MiB as well as v5e/v6e)."""
    g = 4 * h_pad
    b_align = 16 if itemsize < 4 else 8   # bf16 packs 2 rows per sublane
    b_al = _round_up(batch, b_align)
    if b_block is None:
        if b_al >= 128:
            # >=2 batch blocks so v7x's 2 TensorCores can split the recurrence.
            b_block = min(256, _round_up(-(-b_al // 2), b_align))
        else:
            b_block = b_al
    b_pad = _round_up(b_al, b_block)
    if t_block is None:
        fixed = (h_pad * g * itemsize                 # single-buffered W_hh
                 + b_block * h_pad * (itemsize + 4)   # h / c state scratch
                 + 2 * b_block * h_pad * 4)           # double-buffered output
        per_t = 2 * b_block * g * itemsize            # double-buffered xproj slab
        t_block = max(1, min(seq_len, 128, (vmem_budget - fixed) // per_t))
    t_pad = _round_up(seq_len, t_block)
    return t_block, b_block, t_pad, b_pad


def _lstm_recurrence_kernel(xproj_ref, whh_ref, hlast_ref, h_scr, c_scr, *,
                            t_block, tail_steps):
    """One (batch-block, time-block) grid step of the LSTM recurrence.

    xproj_ref : (t_block, tB, 4*Hp)  precomputed x@W_ih^T + (b_ih + b_hh)
    whh_ref   : (Hp, 4*Hp)           recurrent weight, pre-transposed
    hlast_ref : (tB, Hp) f32         output: final hidden state ht[-1]
    h_scr     : (tB, Hp) compute dt  carried h state (MXU operand dtype)
    c_scr     : (tB, Hp) f32         carried c state
    Requires seq_len >= 1; time must be the innermost grid axis (it is).
    """
    t_blk = pl.program_id(1)
    n_t = pl.num_programs(1)
    hp = h_scr.shape[-1]

    @pl.when(t_blk == 0)
    def _():
        h_scr[...] = jnp.zeros_like(h_scr)
        c_scr[...] = jnp.zeros_like(c_scr)

    whh = whh_ref[...]  # loaded once per grid step, reused every timestep

    def run_steps(n_steps):
        def step(s, carry):
            # gates = xproj_t + h_{t-1} @ W_hh^T   (f32 accumulation on MXU)
            gates = xproj_ref[s] + jnp.dot(h_scr[...], whh,
                                           preferred_element_type=jnp.float32)
            # PyTorch gate order: i, f, g, o — each lane-aligned at width Hp.
            i_g = _sigmoid(gates[:, 0 * hp:1 * hp])
            f_g = _sigmoid(gates[:, 1 * hp:2 * hp])
            g_g = jnp.tanh(gates[:, 2 * hp:3 * hp])
            o_g = _sigmoid(gates[:, 3 * hp:4 * hp])
            c_new = f_g * c_scr[...] + i_g * g_g
            c_scr[...] = c_new
            h_scr[...] = (o_g * jnp.tanh(c_new)).astype(h_scr.dtype)
            return carry
        jax.lax.fori_loop(0, n_steps, step, 0, unroll=min(8, n_steps))

    if tail_steps == t_block:
        run_steps(t_block)          # T divides t_block: single clean hot path
    else:
        # Full blocks run the clean loop; only the last block runs the tail.
        pl.when(t_blk != n_t - 1)(lambda: run_steps(t_block))
        pl.when(t_blk == n_t - 1)(lambda: run_steps(tail_steps))

    @pl.when(t_blk == n_t - 1)
    def _():
        hlast_ref[...] = h_scr[...].astype(hlast_ref.dtype)


def lstm_recurrence_pallas(xproj, w_hh_t, *, t_block, b_block, seq_len,
                           compute_dtype, vmem_limit_bytes=48 * 1024 * 1024):
    """xproj: (n_b, T_pad, b_block, 4*Hp); w_hh_t: (Hp, 4*Hp). -> (B_pad, Hp) f32."""
    n_b, t_pad, _, g = xproj.shape
    h_pad = w_hh_t.shape[0]
    n_t = t_pad // t_block
    b_pad = n_b * b_block
    tail_steps = seq_len - (n_t - 1) * t_block   # in [1, t_block]

    kernel = functools.partial(_lstm_recurrence_kernel,
                               t_block=t_block, tail_steps=tail_steps)

    return pl.pallas_call(
        kernel,
        out_shape=jax.ShapeDtypeStruct((b_pad, h_pad), jnp.float32),
        grid_spec=pltpu.PrefetchScalarGridSpec(
            num_scalar_prefetch=0,
            grid=(n_b, n_t),
            in_specs=[
                # contiguous (t_block, b_block, 4*Hp) slab per grid step
                pl.BlockSpec((None, t_block, b_block, g),
                             lambda b, t: (b, t, 0, 0)),
                # grid-invariant recurrent weight: single-buffered
                pl.BlockSpec((h_pad, g), lambda b, t: (0, 0),
                             pipeline_mode=pl.Buffered(1)),
            ],
            out_specs=pl.BlockSpec((b_block, h_pad), lambda b, t: (b, 0)),
            scratch_shapes=[
                pltpu.VMEM((b_block, h_pad), compute_dtype),   # h state
                pltpu.VMEM((b_block, h_pad), jnp.float32),     # c state
            ],
        ),
        compiler_params=pltpu.CompilerParams(
            # batch axis parallel (v7x: shard across 2 TCs), time axis serial
            dimension_semantics=("parallel", "arbitrary"),
            vmem_limit_bytes=vmem_limit_bytes),
    )(xproj, w_hh_t)


def lstm_fixes_len_forward(x_ids, l, params, *, compute_dtype=jnp.float32,
                           t_block=None, b_block=None):
    """Full module forward. x_ids: (B, T) int32, l: (B,) lengths (unused)."""
    del l  # unused by the reference forward (matches the PyTorch module)
    emb = params["embedding"]                       # (vocab, E), row 0 == 0
    B, T = x_ids.shape
    assert T >= 1, "sequence length must be >= 1"
    H = params["w_hh"].shape[1]
    H_pad = _round_up(H, _LANE)                     # lane-aligned gate width
    itemsize = jnp.dtype(compute_dtype).itemsize

    t_block, b_block, T_pad, B_pad = _pick_blocks(
        B, T, H_pad, itemsize, t_block=t_block, b_block=b_block)
    n_b = B_pad // b_block

    # Embedding lookup (padding_idx=0 row is zero); Dropout(0.2) is identity
    # in the deterministic/eval forward.
    x = jnp.take(emb, x_ids, axis=0)                # (B, T, E) f32

    # Lane-aligned gate layout: gate k lives in columns [k*H_pad, k*H_pad+H).
    w_ih_t = _pad_gate_cols(jnp.transpose(params["w_ih"]), H, H_pad)  # (E, 4*Hp)
    bias = _pad_gate_cols(params["b_ih"] + params["b_hh"], H, H_pad)  # (4*Hp,)
    w_hh_t = _pad_gate_cols(jnp.transpose(params["w_hh"]), H, H_pad)  # (H, 4*Hp)
    w_hh_t = jnp.pad(w_hh_t, ((0, H_pad - H), (0, 0))).astype(compute_dtype)

    # Hoisted input projection (one big f32 matmul), fused with the
    # (B,T)->(n_b, T, b_block) blocking so each kernel block is contiguous.
    x_blk = jnp.pad(x, ((0, B_pad - B), (0, 0), (0, 0)))
    x_blk = x_blk.reshape(n_b, b_block, T, -1)
    xproj = jnp.einsum("nbte,eg->ntbg", x_blk, w_ih_t,
                       preferred_element_type=jnp.float32) + bias
    xproj = jnp.pad(xproj, ((0, 0), (0, T_pad - T), (0, 0), (0, 0)))
    xproj = xproj.astype(compute_dtype)             # (n_b, T_pad, b_block, 4*Hp)

    h_last = lstm_recurrence_pallas(
        xproj, w_hh_t, t_block=t_block, b_block=b_block, seq_len=T,
        compute_dtype=compute_dtype)[:B, :H]        # (B, H) f32

    # Tiny (H -> 5) head once per forward: keep it in XLA (a lane-sparse
    # masked store inside the kernel would buy nothing).
    return h_last @ jnp.transpose(params["w_lin"]) + params["b_lin"]   # (B, 5)


def _reference_forward(x_ids, params):
    """Pure-JAX reference (lax.scan) for correctness checking."""
    emb = params["embedding"]
    x = jnp.take(emb, x_ids, axis=0)                # (B, T, E)
    B = x.shape[0]
    H = params["w_hh"].shape[1]

    def step(carry, x_t):
        h, c = carry
        gates = (x_t @ params["w_ih"].T + params["b_ih"]
                 + h @ params["w_hh"].T + params["b_hh"])
        i, f, g, o = jnp.split(gates, 4, axis=-1)
        c = jax.nn.sigmoid(f) * c + jax.nn.sigmoid(i) * jnp.tanh(g)
        h = jax.nn.sigmoid(o) * jnp.tanh(c)
        return (h, c), None

    h0 = jnp.zeros((B, H), jnp.float32)
    (h_last, _), _ = jax.lax.scan(step, (h0, h0), jnp.transpose(x, (1, 0, 2)))
    return h_last @ params["w_lin"].T + params["b_lin"]


def make_params(key, vocab_size, embedding_dim, hidden_dim, n_cls=5):
    ks = jax.random.split(key, 8)
    H = hidden_dim
    k_lstm = 1.0 / jnp.sqrt(H)
    k_lin = 1.0 / jnp.sqrt(H)
    emb = jax.random.normal(ks[0], (vocab_size, embedding_dim), jnp.float32)
    emb = emb.at[0].set(0.0)                        # padding_idx=0
    u = lambda k, shape, a: jax.random.uniform(k, shape, jnp.float32, -a, a)
    return {
        "embedding": emb,
        "w_ih": u(ks[1], (4 * H, embedding_dim), k_lstm),
        "w_hh": u(ks[2], (4 * H, H), k_lstm),
        "b_ih": u(ks[3], (4 * H,), k_lstm),
        "b_hh": u(ks[4], (4 * H,), k_lstm),
        "w_lin": u(ks[5], (n_cls, H), k_lin),
        "b_lin": u(ks[6], (n_cls,), k_lin),
    }


if __name__ == "__main__":
    import numpy as np

    vocab_size, embedding_dim, hidden_dim = 50, 16, 32
    key = jax.random.PRNGKey(0)
    k_p, k_x1, k_x2 = jax.random.split(key, 3)
    params = make_params(k_p, vocab_size, embedding_dim, hidden_dim)

    # Case 1: shapes implied by the module (B=2, T=8), auto block sizes.
    B, T = 2, 8
    x_ids = jax.random.randint(k_x1, (B, T), 0, vocab_size, dtype=jnp.int32)
    lens = jnp.full((B,), T, dtype=jnp.int32)       # `l` — unused by forward
    out = jax.block_until_ready(lstm_fixes_len_forward(x_ids, lens, params))
    ref = _reference_forward(x_ids, params)
    np.testing.assert_allclose(np.asarray(out), np.asarray(ref),
                               rtol=1e-5, atol=1e-5)
    assert out.shape == (B, 5)

    # Case 2: multi-block batch + ragged time tail (exercises the pl.when
    # tail path and the (parallel, arbitrary) 2-D grid).
    B2, T2 = 12, 13
    x_ids2 = jax.random.randint(k_x2, (B2, T2), 0, vocab_size, dtype=jnp.int32)
    lens2 = jnp.full((B2,), T2, dtype=jnp.int32)
    out2 = jax.block_until_ready(
        lstm_fixes_len_forward(x_ids2, lens2, params, t_block=4, b_block=8))
    ref2 = _reference_forward(x_ids2, params)
    np.testing.assert_allclose(np.asarray(out2), np.asarray(ref2),
                               rtol=1e-5, atol=1e-5)

    print("KERNEL_OK")
</pallas_src>

<mosaic_0001>
module attributes {stable_mosaic.version = 11 : i64} {
  func.func @_lstm_recurrence_kernel(%arg0: i32, %arg1: i32, %arg2: memref<1x8x8x512xf32, #tpu.memory_space<vmem>>, %arg3: memref<128x512xf32, #tpu.memory_space<vmem>>, %arg4: memref<8x128xf32, #tpu.memory_space<vmem>>, %arg5: memref<8x128xf32, #tpu.memory_space<vmem>>, %arg6: memref<8x128xf32, #tpu.memory_space<vmem>>) attributes {dimension_semantics = [#tpu.dimension_semantics<parallel>, #tpu.dimension_semantics<arbitrary>], iteration_bounds = array<i64: 1, 1>, scalar_prefetch = 0 : i64, scratch_operands = 2 : i64, tpu.core_type = #tpu.core_type<tc>, window_params = [{transform_indices = @transform_0, window_bounds = array<i64: 1, 8, 8, 512>}, {pipeline_mode = #tpu.pipeline_mode<synchronous>, transform_indices = @transform_1, window_bounds = array<i64: 128, 512>}, {transform_indices = @transform_2, window_bounds = array<i64: 8, 128>}]} {
    %c0_i32 = arith.constant 0 : i32
    %0 = arith.cmpi eq, %arg1, %c0_i32 : i32
    %1 = arith.extui %0 : i1 to i32
    %c0_i32_0 = arith.constant 0 : i32
    %2 = arith.cmpi ne, %1, %c0_i32_0 : i32
    scf.if %2 {
      %cst_172 = arith.constant 0.000000e+00 : f32
      %327 = vector.broadcast %cst_172 : f32 to vector<8x128xf32>
      %c0_173 = arith.constant 0 : index
      %c0_174 = arith.constant 0 : index
      %328 = vector.load %arg5[%c0_173, %c0_174] : memref<8x128xf32, #tpu.memory_space<vmem>>, vector<8x128xf32>
      tpu.vector_store %arg5[%c0_173, %c0_174], %327 {strides = array<i32>} : memref<8x128xf32, #tpu.memory_space<vmem>>, vector<8x128xf32>,
      %cst_175 = arith.constant 0.000000e+00 : f32
      %329 = vector.broadcast %cst_175 : f32 to vector<8x128xf32>
      %c0_176 = arith.constant 0 : index
      %c0_177 = arith.constant 0 : index
      %330 = vector.load %arg6[%c0_176, %c0_177] : memref<8x128xf32, #tpu.memory_space<vmem>>, vector<8x128xf32>
      tpu.vector_store %arg6[%c0_176, %c0_177], %329 {strides = array<i32>} : memref<8x128xf32, #tpu.memory_space<vmem>>, vector<8x128xf32>,
    } else {
    }
    %c0 = arith.constant 0 : index
    %c0_1 = arith.constant 0 : index
    %3 = vector.load %arg3[%c0, %c0_1] : memref<128x512xf32, #tpu.memory_space<vmem>>, vector<128x512xf32>
    %c0_i32_2 = arith.constant 0 : i32
    %c0_3 = arith.constant 0 : index
    %4 = arith.index_cast %c0_i32_2 : i32 to index
    %c0_4 = arith.constant 0 : index
    %c0_5 = arith.constant 0 : index
    %5 = vector.load %arg2[%c0_3, %4, %c0_4, %c0_5] : memref<1x8x8x512xf32, #tpu.memory_space<vmem>>, vector<1x1x8x512xf32>
    %6 = vector.shape_cast %5 : vector<1x1x8x512xf32> to vector<8x512xf32>
    %c0_6 = arith.constant 0 : index
    %c0_7 = arith.constant 0 : index
    %7 = vector.load %arg5[%c0_6, %c0_7] : memref<8x128xf32, #tpu.memory_space<vmem>>, vector<8x128xf32>
    %cst = arith.constant dense<0.000000e+00> : vector<8x512xf32>
    %8 = tpu.matmul %7, %3, %cst {dimension_numbers = #tpu.dot_dimension_numbers<[1], [0], [0], [1], [0, 0, 1, 1], [], []>} : vector<8x128xf32>, vector<128x512xf32>, vector<8x512xf32> -> vector<8x512xf32>
    %9 = arith.addf %6, %8 : vector<8x512xf32>
    %10 = vector.extract_strided_slice %9 {offsets = [0, 0], sizes = [8, 128], strides = [1, 1]} : vector<8x512xf32> to vector<8x128xf32>
    %cst_8 = arith.constant 5.000000e-01 : f32
    %11 = vector.broadcast %cst_8 : f32 to vector<8x128xf32>
    %12 = arith.mulf %11, %10 : vector<8x128xf32>
    %13 = math.tanh %12 : vector<8x128xf32>
    %cst_9 = arith.constant 5.000000e-01 : f32
    %14 = vector.broadcast %cst_9 : f32 to vector<8x128xf32>
    %15 = arith.mulf %14, %13 : vector<8x128xf32>
    %cst_10 = arith.constant 5.000000e-01 : f32
    %16 = vector.broadcast %cst_10 : f32 to vector<8x128xf32>
    %17 = arith.addf %15, %16 : vector<8x128xf32>
    %18 = vector.extract_strided_slice %9 {offsets = [0, 128], sizes = [8, 128], strides = [1, 1]} : vector<8x512xf32> to vector<8x128xf32>
    %cst_11 = arith.constant 5.000000e-01 : f32
    %19 = vector.broadcast %cst_11 : f32 to vector<8x128xf32>
    %20 = arith.mulf %19, %18 : vector<8x128xf32>
    %21 = math.tanh %20 : vector<8x128xf32>
    %cst_12 = arith.constant 5.000000e-01 : f32
    %22 = vector.broadcast %cst_12 : f32 to vector<8x128xf32>
    %23 = arith.mulf %22, %21 : vector<8x128xf32>
    %cst_13 = arith.constant 5.000000e-01 : f32
    %24 = vector.broadcast %cst_13 : f32 to vector<8x128xf32>
    %25 = arith.addf %23, %24 : vector<8x128xf32>
    %26 = vector.extract_strided_slice %9 {offsets = [0, 256], sizes = [8, 128], strides = [1, 1]} : vector<8x512xf32> to vector<8x128xf32>
    %27 = math.tanh %26 : vector<8x128xf32>
    %28 = vector.extract_strided_slice %9 {offsets = [0, 384], sizes = [8, 128], strides = [1, 1]} : vector<8x512xf32> to vector<8x128xf32>
    %cst_14 = arith.constant 5.000000e-01 : f32
    %29 = vector.broadcast %cst_14 : f32 to vector<8x128xf32>
    %30 = arith.mulf %29, %28 : vector<8x128xf32>
    %31 = math.tanh %30 : vector<8x128xf32>
    %cst_15 = arith.constant 5.000000e-01 : f32
    %32 = vector.broadcast %cst_15 : f32 to vector<8x128xf32>
    %33 = arith.mulf %32, %31 : vector<8x128xf32>
    %cst_16 = arith.constant 5.000000e-01 : f32
    %34 = vector.broadcast %cst_16 : f32 to vector<8x128xf32>
    %35 = arith.addf %33, %34 : vector<8x128xf32>
    %c0_17 = arith.constant 0 : index
    %c0_18 = arith.constant 0 : index
    %36 = vector.load %arg6[%c0_17, %c0_18] : memref<8x128xf32, #tpu.memory_space<vmem>>, vector<8x128xf32>
    %37 = arith.mulf %25, %36 : vector<8x128xf32>
    %38 = arith.mulf %17, %27 : vector<8x128xf32>
    %39 = arith.addf %37, %38 : vector<8x128xf32>
    %c0_19 = arith.constant 0 : index
    %c0_20 = arith.constant 0 : index
    %40 = vector.load %arg6[%c0_19, %c0_20] : memref<8x128xf32, #tpu.memory_space<vmem>>, vector<8x128xf32>
    tpu.vector_store %arg6[%c0_19, %c0_20], %39 {strides = array<i32>} : memref<8x128xf32, #tpu.memory_space<vmem>>, vector<8x128xf32>,
    %41 = math.tanh %39 : vector<8x128xf32>
    %42 = arith.mulf %35, %41 : vector<8x128xf32>
    %c0_21 = arith.constant 0 : index
    %c0_22 = arith.constant 0 : index
    %43 = vector.load %arg5[%c0_21, %c0_22] : memref<8x128xf32, #tpu.memory_space<vmem>>, vector<8x128xf32>
    tpu.vector_store %arg5[%c0_21, %c0_22], %42 {strides = array<i32>} : memref<8x128xf32, #tpu.memory_space<vmem>>, vector<8x128xf32>,
    %c1_i32 = arith.constant 1 : i32
    %c0_23 = arith.constant 0 : index
    %44 = arith.index_cast %c1_i32 : i32 to index
    %c0_24 = arith.constant 0 : index
    %c0_25 = arith.constant 0 : index
    %45 = vector.load %arg2[%c0_23, %44, %c0_24, %c0_25] : memref<1x8x8x512xf32, #tpu.memory_space<vmem>>, vector<1x1x8x512xf32>
    %46 = vector.shape_cast %45 : vector<1x1x8x512xf32> to vector<8x512xf32>
    %c0_26 = arith.constant 0 : index
    %c0_27 = arith.constant 0 : index
    %47 = vector.load %arg5[%c0_26, %c0_27] : memref<8x128xf32, #tpu.memory_space<vmem>>, vector<8x128xf32>
    %cst_28 = arith.constant dense<0.000000e+00> : vector<8x512xf32>
    %48 = tpu.matmul %47, %3, %cst_28 {dimension_numbers = #tpu.dot_dimension_numbers<[1], [0], [0], [1], [0, 0, 1, 1], [], []>} : vector<8x128xf32>, vector<128x512xf32>, vector<8x512xf32> -> vector<8x512xf32>
    %49 = arith.addf %46, %48 : vector<8x512xf32>
    %50 = vector.extract_strided_slice %49 {offsets = [0, 0], sizes = [8, 128], strides = [1, 1]} : vector<8x512xf32> to vector<8x128xf32>
    %cst_29 = arith.constant 5.000000e-01 : f32
    %51 = vector.broadcast %cst_29 : f32 to vector<8x128xf32>
    %52 = arith.mulf %51, %50 : vector<8x128xf32>
    %53 = math.tanh %52 : vector<8x128xf32>
    %cst_30 = arith.constant 5.000000e-01 : f32
    %54 = vector.broadcast %cst_30 : f32 to vector<8x128xf32>
    %55 = arith.mulf %54, %53 : vector<8x128xf32>
    %cst_31 = arith.constant 5.000000e-01 : f32
    %56 = vector.broadcast %cst_31 : f32 to vector<8x128xf32>
    %57 = arith.addf %55, %56 : vector<8x128xf32>
    %58 = vector.extract_strided_slice %49 {offsets = [0, 128], sizes = [8, 128], strides = [1, 1]} : vector<8x512xf32> to vector<8x128xf32>
    %cst_32 = arith.constant 5.000000e-01 : f32
    %59 = vector.broadcast %cst_32 : f32 to vector<8x128xf32>
    %60 = arith.mulf %59, %58 : vector<8x128xf32>
    %61 = math.tanh %60 : vector<8x128xf32>
    %cst_33 = arith.constant 5.000000e-01 : f32
    %62 = vector.broadcast %cst_33 : f32 to vector<8x128xf32>
    %63 = arith.mulf %62, %61 : vector<8x128xf32>
    %cst_34 = arith.constant 5.000000e-01 : f32
    %64 = vector.broadcast %cst_34 : f32 to vector<8x128xf32>
    %65 = arith.addf %63, %64 : vector<8x128xf32>
    %66 = vector.extract_strided_slice %49 {offsets = [0, 256], sizes = [8, 128], strides = [1, 1]} : vector<8x512xf32> to vector<8x128xf32>
    %67 = math.tanh %66 : vector<8x128xf32>
    %68 = vector.extract_strided_slice %49 {offsets = [0, 384], sizes = [8, 128], strides = [1, 1]} : vector<8x512xf32> to vector<8x128xf32>
    %cst_35 = arith.constant 5.000000e-01 : f32
    %69 = vector.broadcast %cst_35 : f32 to vector<8x128xf32>
    %70 = arith.mulf %69, %68 : vector<8x128xf32>
    %71 = math.tanh %70 : vector<8x128xf32>
    %cst_36 = arith.constant 5.000000e-01 : f32
    %72 = vector.broadcast %cst_36 : f32 to vector<8x128xf32>
    %73 = arith.mulf %72, %71 : vector<8x128xf32>
    %cst_37 = arith.constant 5.000000e-01 : f32
    %74 = vector.broadcast %cst_37 : f32 to vector<8x128xf32>
    %75 = arith.addf %73, %74 : vector<8x128xf32>
    %c0_38 = arith.constant 0 : index
    %c0_39 = arith.constant 0 : index
    %76 = vector.load %arg6[%c0_38, %c0_39] : memref<8x128xf32, #tpu.memory_space<vmem>>, vector<8x128xf32>
    %77 = arith.mulf %65, %76 : vector<8x128xf32>
    %78 = arith.mulf %57, %67 : vector<8x128xf32>
    %79 = arith.addf %77, %78 : vector<8x128xf32>
    %c0_40 = arith.constant 0 : index
    %c0_41 = arith.constant 0 : index
    %80 = vector.load %arg6[%c0_40, %c0_41] : memref<8x128xf32, #tpu.memory_space<vmem>>, vector<8x128xf32>
    tpu.vector_store %arg6[%c0_40, %c0_41], %79 {strides = array<i32>} : memref<8x128xf32, #tpu.memory_space<vmem>>, vector<8x128xf32>,
    %81 = math.tanh %79 : vector<8x128xf32>
    %82 = arith.mulf %75, %81 : vector<8x128xf32>
    %c0_42 = arith.constant 0 : index
    %c0_43 = arith.constant 0 : index
    %83 = vector.load %arg5[%c0_42, %c0_43] : memref<8x128xf32, #tpu.memory_space<vmem>>, vector<8x128xf32>
    tpu.vector_store %arg5[%c0_42, %c0_43], %82 {strides = array<i32>} : memref<8x128xf32, #tpu.memory_space<vmem>>, vector<8x128xf32>,
    %c2_i32 = arith.constant 2 : i32
    %c0_44 = arith.constant 0 : index
    %84 = arith.index_cast %c2_i32 : i32 to index
    %c0_45 = arith.constant 0 : index
    %c0_46 = arith.constant 0 : index
    %85 = vector.load %arg2[%c0_44, %84, %c0_45, %c0_46] : memref<1x8x8x512xf32, #tpu.memory_space<vmem>>, vector<1x1x8x512xf32>
    %86 = vector.shape_cast %85 : vector<1x1x8x512xf32> to vector<8x512xf32>
    %c0_47 = arith.constant 0 : index
    %c0_48 = arith.constant 0 : index
    %87 = vector.load %arg5[%c0_47, %c0_48] : memref<8x128xf32, #tpu.memory_space<vmem>>, vector<8x128xf32>
    %cst_49 = arith.constant dense<0.000000e+00> : vector<8x512xf32>
    %88 = tpu.matmul %87, %3, %cst_49 {dimension_numbers = #tpu.dot_dimension_numbers<[1], [0], [0], [1], [0, 0, 1, 1], [], []>} : vector<8x128xf32>, vector<128x512xf32>, vector<8x512xf32> -> vector<8x512xf32>
    %89 = arith.addf %86, %88 : vector<8x512xf32>
    %90 = vector.extract_strided_slice %89 {offsets = [0, 0], sizes = [8, 128], strides = [1, 1]} : vector<8x512xf32> to vector<8x128xf32>
    %cst_50 = arith.constant 5.000000e-01 : f32
    %91 = vector.broadcast %cst_50 : f32 to vector<8x128xf32>
    %92 = arith.mulf %91, %90 : vector<8x128xf32>
    %93 = math.tanh %92 : vector<8x128xf32>
    %cst_51 = arith.constant 5.000000e-01 : f32
    %94 = vector.broadcast %cst_51 : f32 to vector<8x128xf32>
    %95 = arith.mulf %94, %93 : vector<8x128xf32>
    %cst_52 = arith.constant 5.000000e-01 : f32
    %96 = vector.broadcast %cst_52 : f32 to vector<8x128xf32>
    %97 = arith.addf %95, %96 : vector<8x128xf32>
    %98 = vector.extract_strided_slice %89 {offsets = [0, 128], sizes = [8, 128], strides = [1, 1]} : vector<8x512xf32> to vector<8x128xf32>
    %cst_53 = arith.constant 5.000000e-01 : f32
    %99 = vector.broadcast %cst_53 : f32 to vector<8x128xf32>
    %100 = arith.mulf %99, %98 : vector<8x128xf32>
    %101 = math.tanh %100 : vector<8x128xf32>
    %cst_54 = arith.constant 5.000000e-01 : f32
    %102 = vector.broadcast %cst_54 : f32 to vector<8x128xf32>
    %103 = arith.mulf %102, %101 : vector<8x128xf32>
    %cst_55 = arith.constant 5.000000e-01 : f32
    %104 = vector.broadcast %cst_55 : f32 to vector<8x128xf32>
    %105 = arith.addf %103, %104 : vector<8x128xf32>
    %106 = vector.extract_strided_slice %89 {offsets = [0, 256], sizes = [8, 128], strides = [1, 1]} : vector<8x512xf32> to vector<8x128xf32>
    %107 = math.tanh %106 : vector<8x128xf32>
    %108 = vector.extract_strided_slice %89 {offsets = [0, 384], sizes = [8, 128], strides = [1, 1]} : vector<8x512xf32> to vector<8x128xf32>
    %cst_56 = arith.constant 5.000000e-01 : f32
    %109 = vector.broadcast %cst_56 : f32 to vector<8x128xf32>
    %110 = arith.mulf %109, %108 : vector<8x128xf32>
    %111 = math.tanh %110 : vector<8x128xf32>
    %cst_57 = arith.constant 5.000000e-01 : f32
    %112 = vector.broadcast %cst_57 : f32 to vector<8x128xf32>
    %113 = arith.mulf %112, %111 : vector<8x128xf32>
    %cst_58 = arith.constant 5.000000e-01 : f32
    %114 = vector.broadcast %cst_58 : f32 to vector<8x128xf32>
    %115 = arith.addf %113, %114 : vector<8x128xf32>
    %c0_59 = arith.constant 0 : index
    %c0_60 = arith.constant 0 : index
    %116 = vector.load %arg6[%c0_59, %c0_60] : memref<8x128xf32, #tpu.memory_space<vmem>>, vector<8x128xf32>
    %117 = arith.mulf %105, %116 : vector<8x128xf32>
    %118 = arith.mulf %97, %107 : vector<8x128xf32>
    %119 = arith.addf %117, %118 : vector<8x128xf32>
    %c0_61 = arith.constant 0 : index
    %c0_62 = arith.constant 0 : index
    %120 = vector.load %arg6[%c0_61, %c0_62] : memref<8x128xf32, #tpu.memory_space<vmem>>, vector<8x128xf32>
    tpu.vector_store %arg6[%c0_61, %c0_62], %119 {strides = array<i32>} : memref<8x128xf32, #tpu.memory_space<vmem>>, vector<8x128xf32>,
    %121 = math.tanh %119 : vector<8x128xf32>
    %122 = arith.mulf %115, %121 : vector<8x128xf32>
    %c0_63 = arith.constant 0 : index
    %c0_64 = arith.constant 0 : index
    %123 = vector.load %arg5[%c0_63, %c0_64] : memref<8x128xf32, #tpu.memory_space<vmem>>, vector<8x128xf32>
    tpu.vector_store %arg5[%c0_63, %c0_64], %122 {strides = array<i32>} : memref<8x128xf32, #tpu.memory_space<vmem>>, vector<8x128xf32>,
    %c3_i32 = arith.constant 3 : i32
    %c0_65 = arith.constant 0 : index
    %124 = arith.index_cast %c3_i32 : i32 to index
    %c0_66 = arith.constant 0 : index
    %c0_67 = arith.constant 0 : index
    %125 = vector.load %arg2[%c0_65, %124, %c0_66, %c0_67] : memref<1x8x8x512xf32, #tpu.memory_space<vmem>>, vector<1x1x8x512xf32>
    %126 = vector.shape_cast %125 : vector<1x1x8x512xf32> to vector<8x512xf32>
    %c0_68 = arith.constant 0 : index
    %c0_69 = arith.constant 0 : index
    %127 = vector.load %arg5[%c0_68, %c0_69] : memref<8x128xf32, #tpu.memory_space<vmem>>, vector<8x128xf32>
    %cst_70 = arith.constant dense<0.000000e+00> : vector<8x512xf32>
    %128 = tpu.matmul %127, %3, %cst_70 {dimension_numbers = #tpu.dot_dimension_numbers<[1], [0], [0], [1], [0, 0, 1, 1], [], []>} : vector<8x128xf32>, vector<128x512xf32>, vector<8x512xf32> -> vector<8x512xf32>
    %129 = arith.addf %126, %128 : vector<8x512xf32>
    %130 = vector.extract_strided_slice %129 {offsets = [0, 0], sizes = [8, 128], strides = [1, 1]} : vector<8x512xf32> to vector<8x128xf32>
    %cst_71 = arith.constant 5.000000e-01 : f32
    %131 = vector.broadcast %cst_71 : f32 to vector<8x128xf32>
    %132 = arith.mulf %131, %130 : vector<8x128xf32>
    %133 = math.tanh %132 : vector<8x128xf32>
    %cst_72 = arith.constant 5.000000e-01 : f32
    %134 = vector.broadcast %cst_72 : f32 to vector<8x128xf32>
    %135 = arith.mulf %134, %133 : vector<8x128xf32>
    %cst_73 = arith.constant 5.000000e-01 : f32
    %136 = vector.broadcast %cst_73 : f32 to vector<8x128xf32>
    %137 = arith.addf %135, %136 : vector<8x128xf32>
    %138 = vector.extract_strided_slice %129 {offsets = [0, 128], sizes = [8, 128], strides = [1, 1]} : vector<8x512xf32> to vector<8x128xf32>
    %cst_74 = arith.constant 5.000000e-01 : f32
    %139 = vector.broadcast %cst_74 : f32 to vector<8x128xf32>
    %140 = arith.mulf %139, %138 : vector<8x128xf32>
    %141 = math.tanh %140 : vector<8x128xf32>
    %cst_75 = arith.constant 5.000000e-01 : f32
    %142 = vector.broadcast %cst_75 : f32 to vector<8x128xf32>
    %143 = arith.mulf %142, %141 : vector<8x128xf32>
    %cst_76 = arith.constant 5.000000e-01 : f32
    %144 = vector.broadcast %cst_76 : f32 to vector<8x128xf32>
    %145 = arith.addf %143, %144 : vector<8x128xf32>
    %146 = vector.extract_strided_slice %129 {offsets = [0, 256], sizes = [8, 128], strides = [1, 1]} : vector<8x512xf32> to vector<8x128xf32>
    %147 = math.tanh %146 : vector<8x128xf32>
    %148 = vector.extract_strided_slice %129 {offsets = [0, 384], sizes = [8, 128], strides = [1, 1]} : vector<8x512xf32> to vector<8x128xf32>
    %cst_77 = arith.constant 5.000000e-01 : f32
    %149 = vector.broadcast %cst_77 : f32 to vector<8x128xf32>
    %150 = arith.mulf %149, %148 : vector<8x128xf32>
    %151 = math.tanh %150 : vector<8x128xf32>
    %cst_78 = arith.constant 5.000000e-01 : f32
    %152 = vector.broadcast %cst_78 : f32 to vector<8x128xf32>
    %153 = arith.mulf %152, %151 : vector<8x128xf32>
    %cst_79 = arith.constant 5.000000e-01 : f32
    %154 = vector.broadcast %cst_79 : f32 to vector<8x128xf32>
    %155 = arith.addf %153, %154 : vector<8x128xf32>
    %c0_80 = arith.constant 0 : index
    %c0_81 = arith.constant 0 : index
    %156 = vector.load %arg6[%c0_80, %c0_81] : memref<8x128xf32, #tpu.memory_space<vmem>>, vector<8x128xf32>
    %157 = arith.mulf %145, %156 : vector<8x128xf32>
    %158 = arith.mulf %137, %147 : vector<8x128xf32>
    %159 = arith.addf %157, %158 : vector<8x128xf32>
    %c0_82 = arith.constant 0 : index
    %c0_83 = arith.constant 0 : index
    %160 = vector.load %arg6[%c0_82, %c0_83] : memref<8x128xf32, #tpu.memory_space<vmem>>, vector<8x128xf32>
    tpu.vector_store %arg6[%c0_82, %c0_83], %159 {strides = array<i32>} : memref<8x128xf32, #tpu.memory_space<vmem>>, vector<8x128xf32>,
    %161 = math.tanh %159 : vector<8x128xf32>
    %162 = arith.mulf %155, %161 : vector<8x128xf32>
    %c0_84 = arith.constant 0 : index
    %c0_85 = arith.constant 0 : index
    %163 = vector.load %arg5[%c0_84, %c0_85] : memref<8x128xf32, #tpu.memory_space<vmem>>, vector<8x128xf32>
    tpu.vector_store %arg5[%c0_84, %c0_85], %162 {strides = array<i32>} : memref<8x128xf32, #tpu.memory_space<vmem>>, vector<8x128xf32>,
    %c4_i32 = arith.constant 4 : i32
    %c0_86 = arith.constant 0 : index
    %164 = arith.index_cast %c4_i32 : i32 to index
    %c0_87 = arith.constant 0 : index
    %c0_88 = arith.constant 0 : index
    %165 = vector.load %arg2[%c0_86, %164, %c0_87, %c0_88] : memref<1x8x8x512xf32, #tpu.memory_space<vmem>>, vector<1x1x8x512xf32>
    %166 = vector.shape_cast %165 : vector<1x1x8x512xf32> to vector<8x512xf32>
    %c0_89 = arith.constant 0 : index
    %c0_90 = arith.constant 0 : index
    %167 = vector.load %arg5[%c0_89, %c0_90] : memref<8x128xf32, #tpu.memory_space<vmem>>, vector<8x128xf32>
    %cst_91 = arith.constant dense<0.000000e+00> : vector<8x512xf32>
    %168 = tpu.matmul %167, %3, %cst_91 {dimension_numbers = #tpu.dot_dimension_numbers<[1], [0], [0], [1], [0, 0, 1, 1], [], []>} : vector<8x128xf32>, vector<128x512xf32>, vector<8x512xf32> -> vector<8x512xf32>
    %169 = arith.addf %166, %168 : vector<8x512xf32>
    %170 = vector.extract_strided_slice %169 {offsets = [0, 0], sizes = [8, 128], strides = [1, 1]} : vector<8x512xf32> to vector<8x128xf32>
    %cst_92 = arith.constant 5.000000e-01 : f32
    %171 = vector.broadcast %cst_92 : f32 to vector<8x128xf32>
    %172 = arith.mulf %171, %170 : vector<8x128xf32>
    %173 = math.tanh %172 : vector<8x128xf32>
    %cst_93 = arith.constant 5.000000e-01 : f32
    %174 = vector.broadcast %cst_93 : f32 to vector<8x128xf32>
    %175 = arith.mulf %174, %173 : vector<8x128xf32>
    %cst_94 = arith.constant 5.000000e-01 : f32
    %176 = vector.broadcast %cst_94 : f32 to vector<8x128xf32>
    %177 = arith.addf %175, %176 : vector<8x128xf32>
    %178 = vector.extract_strided_slice %169 {offsets = [0, 128], sizes = [8, 128], strides = [1, 1]} : vector<8x512xf32> to vector<8x128xf32>
    %cst_95 = arith.constant 5.000000e-01 : f32
    %179 = vector.broadcast %cst_95 : f32 to vector<8x128xf32>
    %180 = arith.mulf %179, %178 : vector<8x128xf32>
    %181 = math.tanh %180 : vector<8x128xf32>
    %cst_96 = arith.constant 5.000000e-01 : f32
    %182 = vector.broadcast %cst_96 : f32 to vector<8x128xf32>
    %183 = arith.mulf %182, %181 : vector<8x128xf32>
    %cst_97 = arith.constant 5.000000e-01 : f32
    %184 = vector.broadcast %cst_97 : f32 to vector<8x128xf32>
    %185 = arith.addf %183, %184 : vector<8x128xf32>
    %186 = vector.extract_strided_slice %169 {offsets = [0, 256], sizes = [8, 128], strides = [1, 1]} : vector<8x512xf32> to vector<8x128xf32>
    %187 = math.tanh %186 : vector<8x128xf32>
    %188 = vector.extract_strided_slice %169 {offsets = [0, 384], sizes = [8, 128], strides = [1, 1]} : vector<8x512xf32> to vector<8x128xf32>
    %cst_98 = arith.constant 5.000000e-01 : f32
    %189 = vector.broadcast %cst_98 : f32 to vector<8x128xf32>
    %190 = arith.mulf %189, %188 : vector<8x128xf32>
    %191 = math.tanh %190 : vector<8x128xf32>
    %cst_99 = arith.constant 5.000000e-01 : f32
    %192 = vector.broadcast %cst_99 : f32 to vector<8x128xf32>
    %193 = arith.mulf %192, %191 : vector<8x128xf32>
    %cst_100 = arith.constant 5.000000e-01 : f32
    %194 = vector.broadcast %cst_100 : f32 to vector<8x128xf32>
    %195 = arith.addf %193, %194 : vector<8x128xf32>
    %c0_101 = arith.constant 0 : index
    %c0_102 = arith.constant 0 : index
    %196 = vector.load %arg6[%c0_101, %c0_102] : memref<8x128xf32, #tpu.memory_space<vmem>>, vector<8x128xf32>
    %197 = arith.mulf %185, %196 : vector<8x128xf32>
    %198 = arith.mulf %177, %187 : vector<8x128xf32>
    %199 = arith.addf %197, %198 : vector<8x128xf32>
    %c0_103 = arith.constant 0 : index
    %c0_104 = arith.constant 0 : index
    %200 = vector.load %arg6[%c0_103, %c0_104] : memref<8x128xf32, #tpu.memory_space<vmem>>, vector<8x128xf32>
    tpu.vector_store %arg6[%c0_103, %c0_104], %199 {strides = array<i32>} : memref<8x128xf32, #tpu.memory_space<vmem>>, vector<8x128xf32>,
    %201 = math.tanh %199 : vector<8x128xf32>
    %202 = arith.mulf %195, %201 : vector<8x128xf32>
    %c0_105 = arith.constant 0 : index
    %c0_106 = arith.constant 0 : index
    %203 = vector.load %arg5[%c0_105, %c0_106] : memref<8x128xf32, #tpu.memory_space<vmem>>, vector<8x128xf32>
    tpu.vector_store %arg5[%c0_105, %c0_106], %202 {strides = array<i32>} : memref<8x128xf32, #tpu.memory_space<vmem>>, vector<8x128xf32>,
    %c5_i32 = arith.constant 5 : i32
    %c0_107 = arith.constant 0 : index
    %204 = arith.index_cast %c5_i32 : i32 to index
    %c0_108 = arith.constant 0 : index
    %c0_109 = arith.constant 0 : index
    %205 = vector.load %arg2[%c0_107, %204, %c0_108, %c0_109] : memref<1x8x8x512xf32, #tpu.memory_space<vmem>>, vector<1x1x8x512xf32>
    %206 = vector.shape_cast %205 : vector<1x1x8x512xf32> to vector<8x512xf32>
    %c0_110 = arith.constant 0 : index
    %c0_111 = arith.constant 0 : index
    %207 = vector.load %arg5[%c0_110, %c0_111] : memref<8x128xf32, #tpu.memory_space<vmem>>, vector<8x128xf32>
    %cst_112 = arith.constant dense<0.000000e+00> : vector<8x512xf32>
    %208 = tpu.matmul %207, %3, %cst_112 {dimension_numbers = #tpu.dot_dimension_numbers<[1], [0], [0], [1], [0, 0, 1, 1], [], []>} : vector<8x128xf32>, vector<128x512xf32>, vector<8x512xf32> -> vector<8x512xf32>
    %209 = arith.addf %206, %208 : vector<8x512xf32>
    %210 = vector.extract_strided_slice %209 {offsets = [0, 0], sizes = [8, 128], strides = [1, 1]} : vector<8x512xf32> to vector<8x128xf32>
    %cst_113 = arith.constant 5.000000e-01 : f32
    %211 = vector.broadcast %cst_113 : f32 to vector<8x128xf32>
    %212 = arith.mulf %211, %210 : vector<8x128xf32>
    %213 = math.tanh %212 : vector<8x128xf32>
    %cst_114 = arith.constant 5.000000e-01 : f32
    %214 = vector.broadcast %cst_114 : f32 to vector<8x128xf32>
    %215 = arith.mulf %214, %213 : vector<8x128xf32>
    %cst_115 = arith.constant 5.000000e-01 : f32
    %216 = vector.broadcast %cst_115 : f32 to vector<8x128xf32>
    %217 = arith.addf %215, %216 : vector<8x128xf32>
    %218 = vector.extract_strided_slice %209 {offsets = [0, 128], sizes = [8, 128], strides = [1, 1]} : vector<8x512xf32> to vector<8x128xf32>
    %cst_116 = arith.constant 5.000000e-01 : f32
    %219 = vector.broadcast %cst_116 : f32 to vector<8x128xf32>
    %220 = arith.mulf %219, %218 : vector<8x128xf32>
    %221 = math.tanh %220 : vector<8x128xf32>
    %cst_117 = arith.constant 5.000000e-01 : f32
    %222 = vector.broadcast %cst_117 : f32 to vector<8x128xf32>
    %223 = arith.mulf %222, %221 : vector<8x128xf32>
    %cst_118 = arith.constant 5.000000e-01 : f32
    %224 = vector.broadcast %cst_118 : f32 to vector<8x128xf32>
    %225 = arith.addf %223, %224 : vector<8x128xf32>
    %226 = vector.extract_strided_slice %209 {offsets = [0, 256], sizes = [8, 128], strides = [1, 1]} : vector<8x512xf32> to vector<8x128xf32>
    %227 = math.tanh %226 : vector<8x128xf32>
    %228 = vector.extract_strided_slice %209 {offsets = [0, 384], sizes = [8, 128], strides = [1, 1]} : vector<8x512xf32> to vector<8x128xf32>
    %cst_119 = arith.constant 5.000000e-01 : f32
    %229 = vector.broadcast %cst_119 : f32 to vector<8x128xf32>
    %230 = arith.mulf %229, %228 : vector<8x128xf32>
    %231 = math.tanh %230 : vector<8x128xf32>
    %cst_120 = arith.constant 5.000000e-01 : f32
    %232 = vector.broadcast %cst_120 : f32 to vector<8x128xf32>
    %233 = arith.mulf %232, %231 : vector<8x128xf32>
    %cst_121 = arith.constant 5.000000e-01 : f32
    %234 = vector.broadcast %cst_121 : f32 to vector<8x128xf32>
    %235 = arith.addf %233, %234 : vector<8x128xf32>
    %c0_122 = arith.constant 0 : index
    %c0_123 = arith.constant 0 : index
    %236 = vector.load %arg6[%c0_122, %c0_123] : memref<8x128xf32, #tpu.memory_space<vmem>>, vector<8x128xf32>
    %237 = arith.mulf %225, %236 : vector<8x128xf32>
    %238 = arith.mulf %217, %227 : vector<8x128xf32>
    %239 = arith.addf %237, %238 : vector<8x128xf32>
    %c0_124 = arith.constant 0 : index
    %c0_125 = arith.constant 0 : index
    %240 = vector.load %arg6[%c0_124, %c0_125] : memref<8x128xf32, #tpu.memory_space<vmem>>, vector<8x128xf32>
    tpu.vector_store %arg6[%c0_124, %c0_125], %239 {strides = array<i32>} : memref<8x128xf32, #tpu.memory_space<vmem>>, vector<8x128xf32>,
    %241 = math.tanh %239 : vector<8x128xf32>
    %242 = arith.mulf %235, %241 : vector<8x128xf32>
    %c0_126 = arith.constant 0 : index
    %c0_127 = arith.constant 0 : index
    %243 = vector.load %arg5[%c0_126, %c0_127] : memref<8x128xf32, #tpu.memory_space<vmem>>, vector<8x128xf32>
    tpu.vector_store %arg5[%c0_126, %c0_127], %242 {strides = array<i32>} : memref<8x128xf32, #tpu.memory_space<vmem>>, vector<8x128xf32>,
    %c6_i32 = arith.constant 6 : i32
    %c0_128 = arith.constant 0 : index
    %244 = arith.index_cast %c6_i32 : i32 to index
    %c0_129 = arith.constant 0 : index
    %c0_130 = arith.constant 0 : index
    %245 = vector.load %arg2[%c0_128, %244, %c0_129, %c0_130] : memref<1x8x8x512xf32, #tpu.memory_space<vmem>>, vector<1x1x8x512xf32>
    %246 = vector.shape_cast %245 : vector<1x1x8x512xf32> to vector<8x512xf32>
    %c0_131 = arith.constant 0 : index
    %c0_132 = arith.constant 0 : index
    %247 = vector.load %arg5[%c0_131, %c0_132] : memref<8x128xf32, #tpu.memory_space<vmem>>, vector<8x128xf32>
    %cst_133 = arith.constant dense<0.000000e+00> : vector<8x512xf32>
    %248 = tpu.matmul %247, %3, %cst_133 {dimension_numbers = #tpu.dot_dimension_numbers<[1], [0], [0], [1], [0, 0, 1, 1], [], []>} : vector<8x128xf32>, vector<128x512xf32>, vector<8x512xf32> -> vector<8x512xf32>
    %249 = arith.addf %246, %248 : vector<8x512xf32>
    %250 = vector.extract_strided_slice %249 {offsets = [0, 0], sizes = [8, 128], strides = [1, 1]} : vector<8x512xf32> to vector<8x128xf32>
    %cst_134 = arith.constant 5.000000e-01 : f32
    %251 = vector.broadcast %cst_134 : f32 to vector<8x128xf32>
    %252 = arith.mulf %251, %250 : vector<8x128xf32>
    %253 = math.tanh %252 : vector<8x128xf32>
    %cst_135 = arith.constant 5.000000e-01 : f32
    %254 = vector.broadcast %cst_135 : f32 to vector<8x128xf32>
    %255 = arith.mulf %254, %253 : vector<8x128xf32>
    %cst_136 = arith.constant 5.000000e-01 : f32
    %256 = vector.broadcast %cst_136 : f32 to vector<8x128xf32>
    %257 = arith.addf %255, %256 : vector<8x128xf32>
    %258 = vector.extract_strided_slice %249 {offsets = [0, 128], sizes = [8, 128], strides = [1, 1]} : vector<8x512xf32> to vector<8x128xf32>
    %cst_137 = arith.constant 5.000000e-01 : f32
    %259 = vector.broadcast %cst_137 : f32 to vector<8x128xf32>
    %260 = arith.mulf %259, %258 : vector<8x128xf32>
    %261 = math.tanh %260 : vector<8x128xf32>
    %cst_138 = arith.constant 5.000000e-01 : f32
    %262 = vector.broadcast %cst_138 : f32 to vector<8x128xf32>
    %263 = arith.mulf %262, %261 : vector<8x128xf32>
    %cst_139 = arith.constant 5.000000e-01 : f32
    %264 = vector.broadcast %cst_139 : f32 to vector<8x128xf32>
    %265 = arith.addf %263, %264 : vector<8x128xf32>
    %266 = vector.extract_strided_slice %249 {offsets = [0, 256], sizes = [8, 128], strides = [1, 1]} : vector<8x512xf32> to vector<8x128xf32>
    %267 = math.tanh %266 : vector<8x128xf32>
    %268 = vector.extract_strided_slice %249 {offsets = [0, 384], sizes = [8, 128], strides = [1, 1]} : vector<8x512xf32> to vector<8x128xf32>
    %cst_140 = arith.constant 5.000000e-01 : f32
    %269 = vector.broadcast %cst_140 : f32 to vector<8x128xf32>
    %270 = arith.mulf %269, %268 : vector<8x128xf32>
    %271 = math.tanh %270 : vector<8x128xf32>
    %cst_141 = arith.constant 5.000000e-01 : f32
    %272 = vector.broadcast %cst_141 : f32 to vector<8x128xf32>
    %273 = arith.mulf %272, %271 : vector<8x128xf32>
    %cst_142 = arith.constant 5.000000e-01 : f32
    %274 = vector.broadcast %cst_142 : f32 to vector<8x128xf32>
    %275 = arith.addf %273, %274 : vector<8x128xf32>
    %c0_143 = arith.constant 0 : index
    %c0_144 = arith.constant 0 : index
    %276 = vector.load %arg6[%c0_143, %c0_144] : memref<8x128xf32, #tpu.memory_space<vmem>>, vector<8x128xf32>
    %277 = arith.mulf %265, %276 : vector<8x128xf32>
    %278 = arith.mulf %257, %267 : vector<8x128xf32>
    %279 = arith.addf %277, %278 : vector<8x128xf32>
    %c0_145 = arith.constant 0 : index
    %c0_146 = arith.constant 0 : index
    %280 = vector.load %arg6[%c0_145, %c0_146] : memref<8x128xf32, #tpu.memory_space<vmem>>, vector<8x128xf32>
    tpu.vector_store %arg6[%c0_145, %c0_146], %279 {strides = array<i32>} : memref<8x128xf32, #tpu.memory_space<vmem>>, vector<8x128xf32>,
    %281 = math.tanh %279 : vector<8x128xf32>
    %282 = arith.mulf %275, %281 : vector<8x128xf32>
    %c0_147 = arith.constant 0 : index
    %c0_148 = arith.constant 0 : index
    %283 = vector.load %arg5[%c0_147, %c0_148] : memref<8x128xf32, #tpu.memory_space<vmem>>, vector<8x128xf32>
    tpu.vector_store %arg5[%c0_147, %c0_148], %282 {strides = array<i32>} : memref<8x128xf32, #tpu.memory_space<vmem>>, vector<8x128xf32>,
    %c7_i32 = arith.constant 7 : i32
    %c0_149 = arith.constant 0 : index
    %284 = arith.index_cast %c7_i32 : i32 to index
    %c0_150 = arith.constant 0 : index
    %c0_151 = arith.constant 0 : index
    %285 = vector.load %arg2[%c0_149, %284, %c0_150, %c0_151] : memref<1x8x8x512xf32, #tpu.memory_space<vmem>>, vector<1x1x8x512xf32>
    %286 = vector.shape_cast %285 : vector<1x1x8x512xf32> to vector<8x512xf32>
    %c0_152 = arith.constant 0 : index
    %c0_153 = arith.constant 0 : index
    %287 = vector.load %arg5[%c0_152, %c0_153] : memref<8x128xf32, #tpu.memory_space<vmem>>, vector<8x128xf32>
    %cst_154 = arith.constant dense<0.000000e+00> : vector<8x512xf32>
    %288 = tpu.matmul %287, %3, %cst_154 {dimension_numbers = #tpu.dot_dimension_numbers<[1], [0], [0], [1], [0, 0, 1, 1], [], []>} : vector<8x128xf32>, vector<128x512xf32>, vector<8x512xf32> -> vector<8x512xf32>
    %289 = arith.addf %286, %288 : vector<8x512xf32>
    %290 = vector.extract_strided_slice %289 {offsets = [0, 0], sizes = [8, 128], strides = [1, 1]} : vector<8x512xf32> to vector<8x128xf32>
    %cst_155 = arith.constant 5.000000e-01 : f32
    %291 = vector.broadcast %cst_155 : f32 to vector<8x128xf32>
    %292 = arith.mulf %291, %290 : vector<8x128xf32>
    %293 = math.tanh %292 : vector<8x128xf32>
    %cst_156 = arith.constant 5.000000e-01 : f32
    %294 = vector.broadcast %cst_156 : f32 to vector<8x128xf32>
    %295 = arith.mulf %294, %293 : vector<8x128xf32>
    %cst_157 = arith.constant 5.000000e-01 : f32
    %296 = vector.broadcast %cst_157 : f32 to vector<8x128xf32>
    %297 = arith.addf %295, %296 : vector<8x128xf32>
    %298 = vector.extract_strided_slice %289 {offsets = [0, 128], sizes = [8, 128], strides = [1, 1]} : vector<8x512xf32> to vector<8x128xf32>
    %cst_158 = arith.constant 5.000000e-01 : f32
    %299 = vector.broadcast %cst_158 : f32 to vector<8x128xf32>
    %300 = arith.mulf %299, %298 : vector<8x128xf32>
    %301 = math.tanh %300 : vector<8x128xf32>
    %cst_159 = arith.constant 5.000000e-01 : f32
    %302 = vector.broadcast %cst_159 : f32 to vector<8x128xf32>
    %303 = arith.mulf %302, %301 : vector<8x128xf32>
    %cst_160 = arith.constant 5.000000e-01 : f32
    %304 = vector.broadcast %cst_160 : f32 to vector<8x128xf32>
    %305 = arith.addf %303, %304 : vector<8x128xf32>
    %306 = vector.extract_strided_slice %289 {offsets = [0, 256], sizes = [8, 128], strides = [1, 1]} : vector<8x512xf32> to vector<8x128xf32>
    %307 = math.tanh %306 : vector<8x128xf32>
    %308 = vector.extract_strided_slice %289 {offsets = [0, 384], sizes = [8, 128], strides = [1, 1]} : vector<8x512xf32> to vector<8x128xf32>
    %cst_161 = arith.constant 5.000000e-01 : f32
    %309 = vector.broadcast %cst_161 : f32 to vector<8x128xf32>
    %310 = arith.mulf %309, %308 : vector<8x128xf32>
    %311 = math.tanh %310 : vector<8x128xf32>
    %cst_162 = arith.constant 5.000000e-01 : f32
    %312 = vector.broadcast %cst_162 : f32 to vector<8x128xf32>
    %313 = arith.mulf %312, %311 : vector<8x128xf32>
    %cst_163 = arith.constant 5.000000e-01 : f32
    %314 = vector.broadcast %cst_163 : f32 to vector<8x128xf32>
    %315 = arith.addf %313, %314 : vector<8x128xf32>
    %c0_164 = arith.constant 0 : index
    %c0_165 = arith.constant 0 : index
    %316 = vector.load %arg6[%c0_164, %c0_165] : memref<8x128xf32, #tpu.memory_space<vmem>>, vector<8x128xf32>
    %317 = arith.mulf %305, %316 : vector<8x128xf32>
    %318 = arith.mulf %297, %307 : vector<8x128xf32>
    %319 = arith.addf %317, %318 : vector<8x128xf32>
    %c0_166 = arith.constant 0 : index
    %c0_167 = arith.constant 0 : index
    %320 = vector.load %arg6[%c0_166, %c0_167] : memref<8x128xf32, #tpu.memory_space<vmem>>, vector<8x128xf32>
    tpu.vector_store %arg6[%c0_166, %c0_167], %319 {strides = array<i32>} : memref<8x128xf32, #tpu.memory_space<vmem>>, vector<8x128xf32>,
    %321 = math.tanh %319 : vector<8x128xf32>
    %322 = arith.mulf %315, %321 : vector<8x128xf32>
    %c0_168 = arith.constant 0 : index
    %c0_169 = arith.constant 0 : index
    %323 = vector.load %arg5[%c0_168, %c0_169] : memref<8x128xf32, #tpu.memory_space<vmem>>, vector<8x128xf32>
    tpu.vector_store %arg5[%c0_168, %c0_169], %322 {strides = array<i32>} : memref<8x128xf32, #tpu.memory_space<vmem>>, vector<8x128xf32>,
    %c8_i32 = arith.constant 8 : i32
    %c0_i32_170 = arith.constant 0 : i32
    %324 = arith.cmpi eq, %arg1, %c0_i32_170 : i32
    %325 = arith.extui %324 : i1 to i32
    %c0_i32_171 = arith.constant 0 : i32
    %326 = arith.cmpi ne, %325, %c0_i32_171 : i32
    scf.if %326 {
      %c0_172 = arith.constant 0 : index
      %c0_173 = arith.constant 0 : index
      %327 = vector.load %arg5[%c0_172, %c0_173] : memref<8x128xf32, #tpu.memory_space<vmem>>, vector<8x128xf32>
      %c0_174 = arith.constant 0 : index
      %c0_175 = arith.constant 0 : index
      %328 = vector.load %arg4[%c0_174, %c0_175] : memref<8x128xf32, #tpu.memory_space<vmem>>, vector<8x128xf32>
      tpu.vector_store %arg4[%c0_174, %c0_175], %327 {strides = array<i32>} : memref<8x128xf32, #tpu.memory_space<vmem>>, vector<8x128xf32>,
    } else {
    }
    return
  }
  func.func @transform_0(%arg0: i32, %arg1: i32) -> (i32, i32, i32, i32) {
    %c0_i32 = arith.constant 0 : i32
    %c0_i32_0 = arith.constant 0 : i32
    %c0_i32_1 = arith.constant 0 : i32
    return %arg0, %arg1, %c0_i32, %c0_i32_0 : i32, i32, i32, i32
  }
  func.func @transform_1(%arg0: i32, %arg1: i32) -> (i32, i32) {
    %c0_i32 = arith.constant 0 : i32
    %c0_i32_0 = arith.constant 0 : i32
    %c0_i32_1 = arith.constant 0 : i32
    return %c0_i32, %c0_i32_0 : i32, i32
  }
  func.func @transform_2(%arg0: i32, %arg1: i32) -> (i32, i32) {
    %c0_i32 = arith.constant 0 : i32
    %c0_i32_0 = arith.constant 0 : i32
    return %arg0, %c0_i32 : i32, i32
  }
}

</mosaic_0001>

<llo_original>
// kernel: tpu_custom_call.1
$region0: #{tpu_custom_call.1}
  #allocation0 [shape = 'u32[]', space=smem, size = 0x4, offset = 0x4, fixed_abs, tag = 'smem constant byte address 0x4 - core index']
  #allocation1 [shape = 'u32[144,128]{1,0:T(1,128)}', space=vmem, size = 0x12000, scoped, tag = 'internal scratch']
  #allocation2 [shape = 'f32[8,128]{1,0:T(8,128)}', space=vmem, size = 0x1000, scoped, tag = 'scratch operand']
  #allocation3 [shape = 'f32[8,128]{1,0:T(8,128)}', space=vmem, size = 0x1000, scoped, tag = 'scratch operand']
  %s0 = inlined_call_operand.hbm [shape: f32[1,8,8,512], index: 0, kind: input, shape index: {}]
  %s1 = inlined_call_operand.hbm [shape: f32[128,512], index: 1, kind: input, shape index: {}]
  %s2 = inlined_call_operand.hbm [shape: f32[8,128], index: 2, kind: output, shape index: {}]
  %s3 = sld [smem:[#allocation0]]
  $region34: #{tpu_custom_call.1} parent=0
    _
  %s5 = ssub.s32 1, %s3
  %s6 = scalar_select 0, %s5, %s3
  $region1: #{tpu_custom_call.1} parent=0
    #allocation4 [shape = 'u8[131072]{0}', space=vmem, size = 0x20000, scoped, tag = 'input window, operand 0, single buffered']
    #allocation5 [shape = 's32[1]{0}', space=sflag, size = 0x4, scoped, tag = 'scoped memory for tpu_custom_call.1']
    #allocation6 [shape = 's32[1]{0}', space=sflag, size = 0x4, scoped, tag = 'scoped memory for tpu_custom_call.1']
    #allocation7 [shape = 'u8[262144]{0}', space=vmem, size = 0x40000, scoped, tag = 'input window, operand 1, single buffered']
    #allocation8 [shape = 's32[1]{0}', space=sflag, size = 0x4, scoped, tag = 'scoped memory for tpu_custom_call.1']
    #allocation9 [shape = 'u8[4096]{0}', space=vmem, size = 0x1000, scoped, tag = 'output window, operand 0, single buffered']
    %7 = vsyncpa [#allocation5], 0
    %8 = vsyncpa [#allocation8], 0
    %9 = vsyncpa [#allocation6], 0
    // Predicated region
    $region2: #{tpu_custom_call.1} parent=1 // pred_check
      _
    $region3: #{tpu_custom_call.1} parent=1 // pred_check_branch
      %11 = sbr.rel (0) target = $region5
    $region4: #{tpu_custom_call.1} parent=1 // pred_region
      %s13 = ssub.s32 4096, 4096
      %14 = vsyncadd [#allocation5], %s13
      %s15 = sshll.u32 [#allocation4], 4
      %s16 = int_to_ptr.vmem [resolvable:$true] %s15
      %21 = dma.hbm_to_vmem [thread:$0]  %s0, 4096, %s16, [#allocation5], 512, 512, 32
    $region5: #{tpu_custom_call.1} parent=1 // pred_fallthru
      _
    // Predicated region
    $region6: #{tpu_custom_call.1} parent=1 // pred_check
      _
    $region7: #{tpu_custom_call.1} parent=1 // pred_check_branch
      %23 = sbr.rel (0) target = $region9
    $region8: #{tpu_custom_call.1} parent=1 // pred_region
      %s25 = ssub.s32 8192, 8192
      %26 = vsyncadd [#allocation8], %s25
      %s27 = sshll.u32 [#allocation7], 4
      %s28 = int_to_ptr.vmem [resolvable:$true] %s27
      %33 = dma.hbm_to_vmem [thread:$0]  %s1, 8192, %s28, [#allocation8], 512, 512, 32
    $region9: #{tpu_custom_call.1} parent=1 // pred_fallthru
      _
    // Predicated region
    $region10: #{tpu_custom_call.1} parent=1 // pred_check
      _
    $region11: #{tpu_custom_call.1} parent=1 // pred_check_branch
      %35 = sbr.rel (0) target = $region13
    $region12: #{tpu_custom_call.1} parent=1 // pred_region
      %36 = dma.done [#allocation5], 4096
    $region13: #{tpu_custom_call.1} parent=1 // pred_fallthru
      _
    // Predicated region
    $region14: #{tpu_custom_call.1} parent=1 // pred_check
      _
    $region15: #{tpu_custom_call.1} parent=1 // pred_check_branch
      %38 = sbr.rel (0) target = $region17
    $region16: #{tpu_custom_call.1} parent=1 // pred_region
      %39 = dma.done [#allocation8], 8192
    $region17: #{tpu_custom_call.1} parent=1 // pred_fallthru
      _
    %p40 = scmp.eq.s32.totalorder 0, 0
    // Predicated region
    $region18: #{tpu_custom_call.1} parent=1 // pred_check
      %p41 = pneg %p40
    $region19: #{tpu_custom_call.1} parent=1 // pred_check_branch
      %43 = sbr.rel (%p41) target = $region21
    $region20: #{tpu_custom_call.1} parent=1 // pred_region
      %44 = vst [vmem:[#allocation2] sm:$0xff] 0.0
      %45 = vst [vmem:[#allocation3] sm:$0xff] 0.0
    $region21: #{tpu_custom_call.1} parent=1 // pred_fallthru
      _
    %v46 = vld [vmem:[#allocation7] sm:$0xff]
    %v47 = vld [vmem:[#allocation7 + $0x8] sm:$0xff]
    %v48 = vld [vmem:[#allocation7 + $0x10] sm:$0xff]
    %v49 = vld [vmem:[#allocation7 + $0x18] sm:$0xff]
    %v50 = vld [vmem:[#allocation7 + $0x20] sm:$0xff]
    %v51 = vld [vmem:[#allocation7 + $0x28] sm:$0xff]
    %v52 = vld [vmem:[#allocation7 + $0x30] sm:$0xff]
    %v53 = vld [vmem:[#allocation7 + $0x38] sm:$0xff]
    %v54 = vld [vmem:[#allocation7 + $0x40] sm:$0xff]
    %v55 = vld [vmem:[#allocation7 + $0x48] sm:$0xff]
    %v56 = vld [vmem:[#allocation7 + $0x50] sm:$0xff]
    %v57 = vld [vmem:[#allocation7 + $0x58] sm:$0xff]
    %v58 = vld [vmem:[#allocation7 + $0x60] sm:$0xff]
    %v59 = vld [vmem:[#allocation7 + $0x68] sm:$0xff]
    %v60 = vld [vmem:[#allocation7 + $0x70] sm:$0xff]
    %v61 = vld [vmem:[#allocation7 + $0x78] sm:$0xff]
    %v62 = vld [vmem:[#allocation7 + $0x80] sm:$0xff]
    %v63 = vld [vmem:[#allocation7 + $0x88] sm:$0xff]
    %v64 = vld [vmem:[#allocation7 + $0x90] sm:$0xff]
    %v65 = vld [vmem:[#allocation7 + $0x98] sm:$0xff]
    %v66 = vld [vmem:[#allocation7 + $0xa0] sm:$0xff]
    %v67 = vld [vmem:[#allocation7 + $0xa8] sm:$0xff]
    %v68 = vld [vmem:[#allocation7 + $0xb0] sm:$0xff]
    %v69 = vld [vmem:[#allocation7 + $0xb8] sm:$0xff]
    %v70 = vld [vmem:[#allocation7 + $0xc0] sm:$0xff]
    %v71 = vld [vmem:[#allocation7 + $0xc8] sm:$0xff]
    %v72 = vld [vmem:[#allocation7 + $0xd0] sm:$0xff]
    %v73 = vld [vmem:[#allocation7 + $0xd8] sm:$0xff]
    %v74 = vld [vmem:[#allocation7 + $0xe0] sm:$0xff]
    %v75 = vld [vmem:[#allocation7 + $0xe8] sm:$0xff]
    %v76 = vld [vmem:[#allocation7 + $0xf0] sm:$0xff]
    %v77 = vld [vmem:[#allocation7 + $0xf8] sm:$0xff]
    %v78 = vld [vmem:[#allocation7 + $0x100] sm:$0xff]
    %v79 = vld [vmem:[#allocation7 + $0x108] sm:$0xff]
    %v80 = vld [vmem:[#allocation7 + $0x110] sm:$0xff]
    %v81 = vld [vmem:[#allocation7 + $0x118] sm:$0xff]
    %v82 = vld [vmem:[#allocation7 + $0x120] sm:$0xff]
    %v83 = vld [vmem:[#allocation7 + $0x128] sm:$0xff]
    %v84 = vld [vmem:[#allocation7 + $0x130] sm:$0xff]
    %v85 = vld [vmem:[#allocation7 + $0x138] sm:$0xff]
    %v86 = vld [vmem:[#allocation7 + $0x140] sm:$0xff]
    %v87 = vld [vmem:[#allocation7 + $0x148] sm:$0xff]
    %v88 = vld [vmem:[#allocation7 + $0x150] sm:$0xff]
    %v89 = vld [vmem:[#allocation7 + $0x158] sm:$0xff]
    %v90 = vld [vmem:[#allocation7 + $0x160] sm:$0xff]
    %v91 = vld [vmem:[#allocation7 + $0x168] sm:$0xff]
    %v92 = vld [vmem:[#allocation7 + $0x170] sm:$0xff]
    %v93 = vld [vmem:[#allocation7 + $0x178] sm:$0xff]
    %v94 = vld [vmem:[#allocation7 + $0x180] sm:$0xff]
    %v95 = vld [vmem:[#allocation7 + $0x188] sm:$0xff]
    %v96 = vld [vmem:[#allocation7 + $0x190] sm:$0xff]
    %v97 = vld [vmem:[#allocation7 + $0x198] sm:$0xff]
    %v98 = vld [vmem:[#allocation7 + $0x1a0] sm:$0xff]
    %v99 = vld [vmem:[#allocation7 + $0x1a8] sm:$0xff]
    %v100 = vld [vmem:[#allocation7 + $0x1b0] sm:$0xff]
    %v101 = vld [vmem:[#allocation7 + $0x1b8] sm:$0xff]
    %v102 = vld [vmem:[#allocation7 + $0x1c0] sm:$0xff]
    %v103 = vld [vmem:[#allocation7 + $0x1c8] sm:$0xff]
    %v104 = vld [vmem:[#allocation7 + $0x1d0] sm:$0xff]
    %v105 = vld [vmem:[#allocation7 + $0x1d8] sm:$0xff]
    %v106 = vld [vmem:[#allocation7 + $0x1e0] sm:$0xff]
    %v107 = vld [vmem:[#allocation7 + $0x1e8] sm:$0xff]
    %v108 = vld [vmem:[#allocation7 + $0x1f0] sm:$0xff]
    %v109 = vld [vmem:[#allocation7 + $0x1f8] sm:$0xff]
    %v110 = vld [vmem:[#allocation4] sm:$0xff]
    %v111 = vld [vmem:[#allocation4 + $0x8] sm:$0xff]
    %v112 = vld [vmem:[#allocation4 + $0x10] sm:$0xff]
    %v113 = vld [vmem:[#allocation4 + $0x18] sm:$0xff]
    %v114 = vld [vmem:[#allocation2] sm:$0xff]
    %115 = vmatprep.subr.mxu0 %v107
    %116 = vmatpush1.msra.mxu0 %v106
    %117 = vmatprep.subr.mxu0 %v103
    %118 = vmatpush1.msra.mxu0 %v102
    %119 = vmatprep.subr.mxu0 %v99
    %120 = vmatpush1.msra.mxu0 %v98
    %121 = vmatprep.subr.mxu0 %v95
    %122 = vmatpush1.msra.mxu0 %v94
    %123 = vmatprep.subr.mxu0 %v91
    %124 = vmatpush1.msra.mxu0 %v90
    %125 = vmatprep.subr.mxu0 %v87
    %126 = vmatpush1.msra.mxu0 %v86
    %127 = vmatprep.subr.mxu0 %v83
    %128 = vmatpush1.msra.mxu0 %v82
    %129 = vmatprep.subr.mxu0 %v79
    %130 = vmatpush1.msra.mxu0 %v78
    %131 = vmatprep.subr.mxu0 %v75
    %132 = vmatpush1.msra.mxu0 %v74
    %133 = vmatprep.subr.mxu0 %v71
    %134 = vmatpush1.msra.mxu0 %v70
    %135 = vmatprep.subr.mxu0 %v67
    %136 = vmatpush1.msra.mxu0 %v66
    %137 = vmatprep.subr.mxu0 %v63
    %138 = vmatpush1.msra.mxu0 %v62
    %139 = vmatprep.subr.mxu0 %v59
    %140 = vmatpush1.msra.mxu0 %v58
    %141 = vmatprep.subr.mxu0 %v55
    %142 = vmatpush1.msra.mxu0 %v54
    %143 = vmatprep.subr.mxu0 %v51
    %144 = vmatpush1.msra.mxu0 %v50
    %145 = vmatprep.subr.mxu0 %v47
    %146 = vmatpush1.msra.mxu0 %v46
    %147 = vmatprep.subr.mxu0 0.0
    %148 = vmatpush2.msra.mxu0 0.0
    %149 = vmatprep.subr.mxu0 0.0
    %150 = vmatpush2.msra.mxu0 0.0
    %151 = vmatprep.subr.mxu0 0.0
    %152 = vmatpush2.msra.mxu0 0.0
    %153 = vmatprep.subr.mxu0 0.0
    %154 = vmatpush2.msra.mxu0 0.0
    %155 = vmatprep.subr.mxu0 0.0
    %156 = vmatpush2.msra.mxu0 0.0
    %157 = vmatprep.subr.mxu0 0.0
    %158 = vmatpush2.msra.mxu0 0.0
    %159 = vmatprep.subr.mxu0 0.0
    %160 = vmatpush2.msra.mxu0 0.0
    %161 = vmatprep.subr.mxu0 0.0
    %162 = vmatpush2.msra.mxu0 0.0
    %163 = vmatprep.subr.mxu0 0.0
    %164 = vmatpush2.msra.mxu0 0.0
    %165 = vmatprep.subr.mxu0 0.0
    %166 = vmatpush2.msra.mxu0 0.0
    %167 = vmatprep.subr.mxu0 0.0
    %168 = vmatpush2.msra.mxu0 0.0
    %169 = vmatprep.subr.mxu0 0.0
    %170 = vmatpush2.msra.mxu0 0.0
    %171 = vmatprep.subr.mxu0 0.0
    %172 = vmatpush2.msra.mxu0 0.0
    %173 = vmatprep.subr.mxu0 0.0
    %174 = vmatpush2.msra.mxu0 0.0
    %175 = vmatprep.subr.mxu0 0.0
    %176 = vmatpush2.msra.mxu0 0.0
    %177 = vmatprep.subr.mxu0 0.0
    %178 = vmatpush2.msra.mxu0 0.0
    %179 = vmatprep.mubr.f32.mxu0 0.0
    %180 = vmatmul.mubr.f32.gmra.mxu0 %v114
    %v181 = vpop.f32.mrf.mxu0
    %v182 = vadd.f32 0.0, %v181
    %v183 = vpop.f32.mrf.mxu0
    %v184 = vadd.f32 0.0, %v183
    %185 = vdwg.mxu0
    %186 = vmatprep.subr.mxu0 %v109
    %187 = vmatpush1.msra.mxu0 %v108
    %188 = vmatprep.subr.mxu0 %v105
    %189 = vmatpush1.msra.mxu0 %v104
    %190 = vmatprep.subr.mxu0 %v101
    %191 = vmatpush1.msra.mxu0 %v100
    %192 = vmatprep.subr.mxu0 %v97
    %193 = vmatpush1.msra.mxu0 %v96
    %194 = vmatprep.subr.mxu0 %v93
    %195 = vmatpush1.msra.mxu0 %v92
    %196 = vmatprep.subr.mxu0 %v89
    %197 = vmatpush1.msra.mxu0 %v88
    %198 = vmatprep.subr.mxu0 %v85
    %199 = vmatpush1.msra.mxu0 %v84
    %200 = vmatprep.subr.mxu0 %v81
    %201 = vmatpush1.msra.mxu0 %v80
    %202 = vmatprep.subr.mxu0 %v77
    %203 = vmatpush1.msra.mxu0 %v76
    %204 = vmatprep.subr.mxu0 %v73
    %205 = vmatpush1.msra.mxu0 %v72
    %206 = vmatprep.subr.mxu0 %v69
    %207 = vmatpush1.msra.mxu0 %v68
    %208 = vmatprep.subr.mxu0 %v65
    %209 = vmatpush1.msra.mxu0 %v64
    %210 = vmatprep.subr.mxu0 %v61
    %211 = vmatpush1.msra.mxu0 %v60
    %212 = vmatprep.subr.mxu0 %v57
    %213 = vmatpush1.msra.mxu0 %v56
    %214 = vmatprep.subr.mxu0 %v53
    %215 = vmatpush1.msra.mxu0 %v52
    %216 = vmatprep.subr.mxu0 %v49
    %217 = vmatpush1.msra.mxu0 %v48
    %218 = vmatprep.subr.mxu0 0.0
    %219 = vmatpush2.msra.mxu0 0.0
    %220 = vmatprep.subr.mxu0 0.0
    %221 = vmatpush2.msra.mxu0 0.0
    %222 = vmatprep.subr.mxu0 0.0
    %223 = vmatpush2.msra.mxu0 0.0
    %224 = vmatprep.subr.mxu0 0.0
    %225 = vmatpush2.msra.mxu0 0.0
    %226 = vmatprep.subr.mxu0 0.0
    %227 = vmatpush2.msra.mxu0 0.0
    %228 = vmatprep.subr.mxu0 0.0
    %229 = vmatpush2.msra.mxu0 0.0
    %230 = vmatprep.subr.mxu0 0.0
    %231 = vmatpush2.msra.mxu0 0.0
    %232 = vmatprep.subr.mxu0 0.0
    %233 = vmatpush2.msra.mxu0 0.0
    %234 = vmatprep.subr.mxu0 0.0
    %235 = vmatpush2.msra.mxu0 0.0
    %236 = vmatprep.subr.mxu0 0.0
    %237 = vmatpush2.msra.mxu0 0.0
    %238 = vmatprep.subr.mxu0 0.0
    %239 = vmatpush2.msra.mxu0 0.0
    %240 = vmatprep.subr.mxu0 0.0
    %241 = vmatpush2.msra.mxu0 0.0
    %242 = vmatprep.subr.mxu0 0.0
    %243 = vmatpush2.msra.mxu0 0.0
    %244 = vmatprep.subr.mxu0 0.0
    %245 = vmatpush2.msra.mxu0 0.0
    %246 = vmatprep.subr.mxu0 0.0
    %247 = vmatpush2.msra.mxu0 0.0
    %248 = vmatprep.subr.mxu0 0.0
    %249 = vmatpush2.msra.mxu0 0.0
    %250 = vmatprep.mubr.f32.mxu0 0.0
    %251 = vmatmul.mubr.f32.gmra.mxu0 %v114
    %v252 = vpop.f32.mrf.mxu0
    %v253 = vadd.f32 0.0, %v252
    %v254 = vpop.f32.mrf.mxu0
    %v255 = vadd.f32 0.0, %v254
    %256 = vdwg.mxu0
    %v257 = vadd.f32 %v110, %v182
    %v258 = vadd.f32 %v111, %v184
    %v259 = vadd.f32 %v112, %v253
    %v260 = vadd.f32 %v113, %v255
    %v261 = vmul.f32 %v257, 0.5
    %v262 = vtanh.pop %v261
    %v263 = vmul.f32 %v262, 0.5
    %v264 = vadd.f32 %v263, 0.5
    %v265 = vmul.f32 %v258, 0.5
    %v266 = vtanh.pop %v265
    %v267 = vmul.f32 %v266, 0.5
    %v268 = vadd.f32 %v267, 0.5
    %v269 = vtanh.pop %v259
    %v270 = vmul.f32 %v260, 0.5
    %v271 = vtanh.pop %v270
    %v272 = vmul.f32 %v271, 0.5
    %v273 = vadd.f32 %v272, 0.5
    %v274 = vld [vmem:[#allocation3] sm:$0xff]
    %v275 = vmul.f32 %v268, %v274
    %v276 = vmul.f32 %v264, %v269
    %v277 = vadd.f32 %v275, %v276
    %278 = vst [vmem:[#allocation3] sm:$0xff] %v277
    %v279 = vtanh.pop %v277
    %v280 = vmul.f32 %v273, %v279
    %281 = vst [vmem:[#allocation2] sm:$0xff] %v280
    %s282 = scalar_lea.vmem [#allocation4], 32
    %v283 = vld [vmem:[%s282] sm:$0xff]
    %v284 = vld [vmem:[%s282 + $0x8] sm:$0xff]
    %v285 = vld [vmem:[%s282 + $0x10] sm:$0xff]
    %v286 = vld [vmem:[%s282 + $0x18] sm:$0xff]
    %v287 = vld [vmem:[#allocation2] sm:$0xff]
    %288 = vmatprep.subr.mxu0 %v107
    %289 = vmatpush1.msra.mxu0 %v106
    %290 = vmatprep.subr.mxu0 %v103
    %291 = vmatpush1.msra.mxu0 %v102
    %292 = vmatprep.subr.mxu0 %v99
    %293 = vmatpush1.msra.mxu0 %v98
    %294 = vmatprep.subr.mxu0 %v95
    %295 = vmatpush1.msra.mxu0 %v94
    %296 = vmatprep.subr.mxu0 %v91
    %297 = vmatpush1.msra.mxu0 %v90
    %298 = vmatprep.subr.mxu0 %v87
    %299 = vmatpush1.msra.mxu0 %v86
    %300 = vmatprep.subr.mxu0 %v83
    %301 = vmatpush1.msra.mxu0 %v82
    %302 = vmatprep.subr.mxu0 %v79
    %303 = vmatpush1.msra.mxu0 %v78
    %304 = vmatprep.subr.mxu0 %v75
    %305 = vmatpush1.msra.mxu0 %v74
    %306 = vmatprep.subr.mxu0 %v71
    %307 = vmatpush1.msra.mxu0 %v70
    %308 = vmatprep.subr.mxu0 %v67
    %309 = vmatpush1.msra.mxu0 %v66
    %310 = vmatprep.subr.mxu0 %v63
    %311 = vmatpush1.msra.mxu0 %v62
    %312 = vmatprep.subr.mxu0 %v59
    %313 = vmatpush1.msra.mxu0 %v58
    %314 = vmatprep.subr.mxu0 %v55
    %315 = vmatpush1.msra.mxu0 %v54
    %316 = vmatprep.subr.mxu0 %v51
    %317 = vmatpush1.msra.mxu0 %v50
    %318 = vmatprep.subr.mxu0 %v47
    %319 = vmatpush1.msra.mxu0 %v46
    %320 = vmatprep.subr.mxu0 0.0
    %321 = vmatpush2.msra.mxu0 0.0
    %322 = vmatprep.subr.mxu0 0.0
    %323 = vmatpush2.msra.mxu0 0.0
    %324 = vmatprep.subr.mxu0 0.0
    %325 = vmatpush2.msra.mxu0 0.0
    %326 = vmatprep.subr.mxu0 0.0
    %327 = vmatpush2.msra.mxu0 0.0
    %328 = vmatprep.subr.mxu0 0.0
    %329 = vmatpush2.msra.mxu0 0.0
    %330 = vmatprep.subr.mxu0 0.0
    %331 = vmatpush2.msra.mxu0 0.0
    %332 = vmatprep.subr.mxu0 0.0
    %333 = vmatpush2.msra.mxu0 0.0
    %334 = vmatprep.subr.mxu0 0.0
    %335 = vmatpush2.msra.mxu0 0.0
    %336 = vmatprep.subr.mxu0 0.0
    %337 = vmatpush2.msra.mxu0 0.0
    %338 = vmatprep.subr.mxu0 0.0
    %339 = vmatpush2.msra.mxu0 0.0
    %340 = vmatprep.subr.mxu0 0.0
    %341 = vmatpush2.msra.mxu0 0.0
    %342 = vmatprep.subr.mxu0 0.0
    %343 = vmatpush2.msra.mxu0 0.0
    %344 = vmatprep.subr.mxu0 0.0
    %345 = vmatpush2.msra.mxu0 0.0
    %346 = vmatprep.subr.mxu0 0.0
    %347 = vmatpush2.msra.mxu0 0.0
    %348 = vmatprep.subr.mxu0 0.0
    %349 = vmatpush2.msra.mxu0 0.0
    %350 = vmatprep.subr.mxu0 0.0
    %351 = vmatpush2.msra.mxu0 0.0
    %352 = vmatprep.mubr.f32.mxu0 0.0
    %353 = vmatmul.mubr.f32.gmra.mxu0 %v287
    %v354 = vpop.f32.mrf.mxu0
    %v355 = vadd.f32 0.0, %v354
    %v356 = vpop.f32.mrf.mxu0
    %v357 = vadd.f32 0.0, %v356
    %358 = vdwg.mxu0
    %359 = vmatprep.subr.mxu0 %v109
    %360 = vmatpush1.msra.mxu0 %v108
    %361 = vmatprep.subr.mxu0 %v105
    %362 = vmatpush1.msra.mxu0 %v104
    %363 = vmatprep.subr.mxu0 %v101
    %364 = vmatpush1.msra.mxu0 %v100
    %365 = vmatprep.subr.mxu0 %v97
    %366 = vmatpush1.msra.mxu0 %v96
    %367 = vmatprep.subr.mxu0 %v93
    %368 = vmatpush1.msra.mxu0 %v92
    %369 = vmatprep.subr.mxu0 %v89
    %370 = vmatpush1.msra.mxu0 %v88
    %371 = vmatprep.subr.mxu0 %v85
    %372 = vmatpush1.msra.mxu0 %v84
    %373 = vmatprep.subr.mxu0 %v81
    %374 = vmatpush1.msra.mxu0 %v80
    %375 = vmatprep.subr.mxu0 %v77
    %376 = vmatpush1.msra.mxu0 %v76
    %377 = vmatprep.subr.mxu0 %v73
    %378 = vmatpush1.msra.mxu0 %v72
    %379 = vmatprep.subr.mxu0 %v69
    %380 = vmatpush1.msra.mxu0 %v68
    %381 = vmatprep.subr.mxu0 %v65
    %382 = vmatpush1.msra.mxu0 %v64
    %383 = vmatprep.subr.mxu0 %v61
    %384 = vmatpush1.msra.mxu0 %v60
    %385 = vmatprep.subr.mxu0 %v57
    %386 = vmatpush1.msra.mxu0 %v56
    %387 = vmatprep.subr.mxu0 %v53
    %388 = vmatpush1.msra.mxu0 %v52
    %389 = vmatprep.subr.mxu0 %v49
    %390 = vmatpush1.msra.mxu0 %v48
    %391 = vmatprep.subr.mxu0 0.0
    %392 = vmatpush2.msra.mxu0 0.0
    %393 = vmatprep.subr.mxu0 0.0
    %394 = vmatpush2.msra.mxu0 0.0
    %395 = vmatprep.subr.mxu0 0.0
    %396 = vmatpush2.msra.mxu0 0.0
    %397 = vmatprep.subr.mxu0 0.0
    %398 = vmatpush2.msra.mxu0 0.0
    %399 = vmatprep.subr.mxu0 0.0
    %400 = vmatpush2.msra.mxu0 0.0
    %401 = vmatprep.subr.mxu0 0.0
    %402 = vmatpush2.msra.mxu0 0.0
    %403 = vmatprep.subr.mxu0 0.0
    %404 = vmatpush2.msra.mxu0 0.0
    %405 = vmatprep.subr.mxu0 0.0
    %406 = vmatpush2.msra.mxu0 0.0
    %407 = vmatprep.subr.mxu0 0.0
    %408 = vmatpush2.msra.mxu0 0.0
    %409 = vmatprep.subr.mxu0 0.0
    %410 = vmatpush2.msra.mxu0 0.0
    %411 = vmatprep.subr.mxu0 0.0
    %412 = vmatpush2.msra.mxu0 0.0
    %413 = vmatprep.subr.mxu0 0.0
    %414 = vmatpush2.msra.mxu0 0.0
    %415 = vmatprep.subr.mxu0 0.0
    %416 = vmatpush2.msra.mxu0 0.0
    %417 = vmatprep.subr.mxu0 0.0
    %418 = vmatpush2.msra.mxu0 0.0
    %419 = vmatprep.subr.mxu0 0.0
    %420 = vmatpush2.msra.mxu0 0.0
    %421 = vmatprep.subr.mxu0 0.0
    %422 = vmatpush2.msra.mxu0 0.0
    %423 = vmatprep.mubr.f32.mxu0 0.0
    %424 = vmatmul.mubr.f32.gmra.mxu0 %v287
    %v425 = vpop.f32.mrf.mxu0
    %v426 = vadd.f32 0.0, %v425
    %v427 = vpop.f32.mrf.mxu0
    %v428 = vadd.f32 0.0, %v427
    %429 = vdwg.mxu0
    %v430 = vadd.f32 %v283, %v355
    %v431 = vadd.f32 %v284, %v357
    %v432 = vadd.f32 %v285, %v426
    %v433 = vadd.f32 %v286, %v428
    %v434 = vmul.f32 %v430, 0.5
    %v435 = vtanh.pop %v434
    %v436 = vmul.f32 %v435, 0.5
    %v437 = vadd.f32 %v436, 0.5
    %v438 = vmul.f32 %v431, 0.5
    %v439 = vtanh.pop %v438
    %v440 = vmul.f32 %v439, 0.5
    %v441 = vadd.f32 %v440, 0.5
    %v442 = vtanh.pop %v432
    %v443 = vmul.f32 %v433, 0.5
    %v444 = vtanh.pop %v443
    %v445 = vmul.f32 %v444, 0.5
    %v446 = vadd.f32 %v445, 0.5
    %v447 = vld [vmem:[#allocation3] sm:$0xff]
    %v448 = vmul.f32 %v441, %v447
    %v449 = vmul.f32 %v437, %v442
    %v450 = vadd.f32 %v448, %v449
    %451 = vst [vmem:[#allocation3] sm:$0xff] %v450
    %v452 = vtanh.pop %v450
    %v453 = vmul.f32 %v446, %v452
    %454 = vst [vmem:[#allocation2] sm:$0xff] %v453
    %s455 = scalar_lea.vmem [#allocation4], 64
    %v456 = vld [vmem:[%s455] sm:$0xff]
    %v457 = vld [vmem:[%s455 + $0x8] sm:$0xff]
    %v458 = vld [vmem:[%s455 + $0x10] sm:$0xff]
    %v459 = vld [vmem:[%s455 + $0x18] sm:$0xff]
    %v460 = vld [vmem:[#allocation2] sm:$0xff]
    %461 = vmatprep.subr.mxu0 %v107
    %462 = vmatpush1.msra.mxu0 %v106
    %463 = vmatprep.subr.mxu0 %v103
    %464 = vmatpush1.msra.mxu0 %v102
    %465 = vmatprep.subr.mxu0 %v99
    %466 = vmatpush1.msra.mxu0 %v98
    %467 = vmatprep.subr.mxu0 %v95
    %468 = vmatpush1.msra.mxu0 %v94
    %469 = vmatprep.subr.mxu0 %v91
    %470 = vmatpush1.msra.mxu0 %v90
    %471 = vmatprep.subr.mxu0 %v87
    %472 = vmatpush1.msra.mxu0 %v86
    %473 = vmatprep.subr.mxu0 %v83
    %474 = vmatpush1.msra.mxu0 %v82
    %475 = vmatprep.subr.mxu0 %v79
    %476 = vmatpush1.msra.mxu0 %v78
    %477 = vmatprep.subr.mxu0 %v75
    %478 = vmatpush1.msra.mxu0 %v74
    %479 = vmatprep.subr.mxu0 %v71
    %480 = vmatpush1.msra.mxu0 %v70
    %481 = vmatprep.subr.mxu0 %v67
    %482 = vmatpush1.msra.mxu0 %v66
    %483 = vmatprep.subr.mxu0 %v63
    %484 = vmatpush1.msra.mxu0 %v62
    %485 = vmatprep.subr.mxu0 %v59
    %486 = vmatpush1.msra.mxu0 %v58
    %487 = vmatprep.subr.mxu0 %v55
    %488 = vmatpush1.msra.mxu0 %v54
    %489 = vmatprep.subr.mxu0 %v51
    %490 = vmatpush1.msra.mxu0 %v50
    %491 = vmatprep.subr.mxu0 %v47
    %492 = vmatpush1.msra.mxu0 %v46
    %493 = vmatprep.subr.mxu0 0.0
    %494 = vmatpush2.msra.mxu0 0.0
    %495 = vmatprep.subr.mxu0 0.0
    %496 = vmatpush2.msra.mxu0 0.0
    %497 = vmatprep.subr.mxu0 0.0
    %498 = vmatpush2.msra.mxu0 0.0
    %499 = vmatprep.subr.mxu0 0.0
    %500 = vmatpush2.msra.mxu0 0.0
    %501 = vmatprep.subr.mxu0 0.0
    %502 = vmatpush2.msra.mxu0 0.0
    %503 = vmatprep.subr.mxu0 0.0
    %504 = vmatpush2.msra.mxu0 0.0
    %505 = vmatprep.subr.mxu0 0.0
    %506 = vmatpush2.msra.mxu0 0.0
    %507 = vmatprep.subr.mxu0 0.0
    %508 = vmatpush2.msra.mxu0 0.0
    %509 = vmatprep.subr.mxu0 0.0
    %510 = vmatpush2.msra.mxu0 0.0
    %511 = vmatprep.subr.mxu0 0.0
    %512 = vmatpush2.msra.mxu0 0.0
    %513 = vmatprep.subr.mxu0 0.0
    %514 = vmatpush2.msra.mxu0 0.0
    %515 = vmatprep.subr.mxu0 0.0
    %516 = vmatpush2.msra.mxu0 0.0
    %517 = vmatprep.subr.mxu0 0.0
    %518 = vmatpush2.msra.mxu0 0.0
    %519 = vmatprep.subr.mxu0 0.0
    %520 = vmatpush2.msra.mxu0 0.0
    %521 = vmatprep.subr.mxu0 0.0
    %522 = vmatpush2.msra.mxu0 0.0
    %523 = vmatprep.subr.mxu0 0.0
    %524 = vmatpush2.msra.mxu0 0.0
    %525 = vmatprep.mubr.f32.mxu0 0.0
    %526 = vmatmul.mubr.f32.gmra.mxu0 %v460
    %v527 = vpop.f32.mrf.mxu0
    %v528 = vadd.f32 0.0, %v527
    %v529 = vpop.f32.mrf.mxu0
    %v530 = vadd.f32 0.0, %v529
    %531 = vdwg.mxu0
    %532 = vmatprep.subr.mxu0 %v109
    %533 = vmatpush1.msra.mxu0 %v108
    %534 = vmatprep.subr.mxu0 %v105
    %535 = vmatpush1.msra.mxu0 %v104
    %536 = vmatprep.subr.mxu0 %v101
    %537 = vmatpush1.msra.mxu0 %v100
    %538 = vmatprep.subr.mxu0 %v97
    %539 = vmatpush1.msra.mxu0 %v96
    %540 = vmatprep.subr.mxu0 %v93
    %541 = vmatpush1.msra.mxu0 %v92
    %542 = vmatprep.subr.mxu0 %v89
    %543 = vmatpush1.msra.mxu0 %v88
    %544 = vmatprep.subr.mxu0 %v85
    %545 = vmatpush1.msra.mxu0 %v84
    %546 = vmatprep.subr.mxu0 %v81
    %547 = vmatpush1.msra.mxu0 %v80
    %548 = vmatprep.subr.mxu0 %v77
    %549 = vmatpush1.msra.mxu0 %v76
    %550 = vmatprep.subr.mxu0 %v73
    %551 = vmatpush1.msra.mxu0 %v72
    %552 = vmatprep.subr.mxu0 %v69
    %553 = vmatpush1.msra.mxu0 %v68
    %554 = vmatprep.subr.mxu0 %v65
    %555 = vmatpush1.msra.mxu0 %v64
    %556 = vmatprep.subr.mxu0 %v61
    %557 = vmatpush1.msra.mxu0 %v60
    %558 = vmatprep.subr.mxu0 %v57
    %559 = vmatpush1.msra.mxu0 %v56
    %560 = vmatprep.subr.mxu0 %v53
    %561 = vmatpush1.msra.mxu0 %v52
    %562 = vmatprep.subr.mxu0 %v49
    %563 = vmatpush1.msra.mxu0 %v48
    %564 = vmatprep.subr.mxu0 0.0
    %565 = vmatpush2.msra.mxu0 0.0
    %566 = vmatprep.subr.mxu0 0.0
    %567 = vmatpush2.msra.mxu0 0.0
    %568 = vmatprep.subr.mxu0 0.0
    %569 = vmatpush2.msra.mxu0 0.0
    %570 = vmatprep.subr.mxu0 0.0
    %571 = vmatpush2.msra.mxu0 0.0
    %572 = vmatprep.subr.mxu0 0.0
    %573 = vmatpush2.msra.mxu0 0.0
    %574 = vmatprep.subr.mxu0 0.0
    %575 = vmatpush2.msra.mxu0 0.0
    %576 = vmatprep.subr.mxu0 0.0
    %577 = vmatpush2.msra.mxu0 0.0
    %578 = vmatprep.subr.mxu0 0.0
    %579 = vmatpush2.msra.mxu0 0.0
    %580 = vmatprep.subr.mxu0 0.0
    %581 = vmatpush2.msra.mxu0 0.0
    %582 = vmatprep.subr.mxu0 0.0
    %583 = vmatpush2.msra.mxu0 0.0
    %584 = vmatprep.subr.mxu0 0.0
    %585 = vmatpush2.msra.mxu0 0.0
    %586 = vmatprep.subr.mxu0 0.0
    %587 = vmatpush2.msra.mxu0 0.0
    %588 = vmatprep.subr.mxu0 0.0
    %589 = vmatpush2.msra.mxu0 0.0
    %590 = vmatprep.subr.mxu0 0.0
    %591 = vmatpush2.msra.mxu0 0.0
    %592 = vmatprep.subr.mxu0 0.0
    %593 = vmatpush2.msra.mxu0 0.0
    %594 = vmatprep.subr.mxu0 0.0
    %595 = vmatpush2.msra.mxu0 0.0
    %596 = vmatprep.mubr.f32.mxu0 0.0
    %597 = vmatmul.mubr.f32.gmra.mxu0 %v460
    %v598 = vpop.f32.mrf.mxu0
    %v599 = vadd.f32 0.0, %v598
    %v600 = vpop.f32.mrf.mxu0
    %v601 = vadd.f32 0.0, %v600
    %602 = vdwg.mxu0
    %v603 = vadd.f32 %v456, %v528
    %v604 = vadd.f32 %v457, %v530
    %v605 = vadd.f32 %v458, %v599
    %v606 = vadd.f32 %v459, %v601
    %v607 = vmul.f32 %v603, 0.5
    %v608 = vtanh.pop %v607
    %v609 = vmul.f32 %v608, 0.5
    %v610 = vadd.f32 %v609, 0.5
    %v611 = vmul.f32 %v604, 0.5
    %v612 = vtanh.pop %v611
    %v613 = vmul.f32 %v612, 0.5
    %v614 = vadd.f32 %v613, 0.5
    %v615 = vtanh.pop %v605
    %v616 = vmul.f32 %v606, 0.5
    %v617 = vtanh.pop %v616
    %v618 = vmul.f32 %v617, 0.5
    %v619 = vadd.f32 %v618, 0.5
    %v620 = vld [vmem:[#allocation3] sm:$0xff]
    %v621 = vmul.f32 %v614, %v620
    %v622 = vmul.f32 %v610, %v615
    %v623 = vadd.f32 %v621, %v622
    %624 = vst [vmem:[#allocation3] sm:$0xff] %v623
    %v625 = vtanh.pop %v623
    %v626 = vmul.f32 %v619, %v625
    %627 = vst [vmem:[#allocation2] sm:$0xff] %v626
    %s628 = scalar_lea.vmem [#allocation4], 96
    %v629 = vld [vmem:[%s628] sm:$0xff]
    %v630 = vld [vmem:[%s628 + $0x8] sm:$0xff]
    %v631 = vld [vmem:[%s628 + $0x10] sm:$0xff]
    %v632 = vld [vmem:[%s628 + $0x18] sm:$0xff]
    %v633 = vld [vmem:[#allocation2] sm:$0xff]
    %634 = vmatprep.subr.mxu0 %v107
    %635 = vmatpush1.msra.mxu0 %v106
    %636 = vmatprep.subr.mxu0 %v103
    %637 = vmatpush1.msra.mxu0 %v102
    %638 = vmatprep.subr.mxu0 %v99
    %639 = vmatpush1.msra.mxu0 %v98
    %640 = vmatprep.subr.mxu0 %v95
    %641 = vmatpush1.msra.mxu0 %v94
    %642 = vmatprep.subr.mxu0 %v91
    %643 = vmatpush1.msra.mxu0 %v90
    %644 = vmatprep.subr.mxu0 %v87
    %645 = vmatpush1.msra.mxu0 %v86
    %646 = vmatprep.subr.mxu0 %v83
    %647 = vmatpush1.msra.mxu0 %v82
    %648 = vmatprep.subr.mxu0 %v79
    %649 = vmatpush1.msra.mxu0 %v78
    %650 = vmatprep.subr.mxu0 %v75
    %651 = vmatpush1.msra.mxu0 %v74
    %652 = vmatprep.subr.mxu0 %v71
    %653 = vmatpush1.msra.mxu0 %v70
    %654 = vmatprep.subr.mxu0 %v67
    %655 = vmatpush1.msra.mxu0 %v66
    %656 = vmatprep.subr.mxu0 %v63
    %657 = vmatpush1.msra.mxu0 %v62
    %658 = vmatprep.subr.mxu0 %v59
    %659 = vmatpush1.msra.mxu0 %v58
    %660 = vmatprep.subr.mxu0 %v55
    %661 = vmatpush1.msra.mxu0 %v54
    %662 = vmatprep.subr.mxu0 %v51
    %663 = vmatpush1.msra.mxu0 %v50
    %664 = vmatprep.subr.mxu0 %v47
    %665 = vmatpush1.msra.mxu0 %v46
    %666 = vmatprep.subr.mxu0 0.0
    %667 = vmatpush2.msra.mxu0 0.0
    %668 = vmatprep.subr.mxu0 0.0
    %669 = vmatpush2.msra.mxu0 0.0
    %670 = vmatprep.subr.mxu0 0.0
    %671 = vmatpush2.msra.mxu0 0.0
    %672 = vmatprep.subr.mxu0 0.0
    %673 = vmatpush2.msra.mxu0 0.0
    %674 = vmatprep.subr.mxu0 0.0
    %675 = vmatpush2.msra.mxu0 0.0
    %676 = vmatprep.subr.mxu0 0.0
    %677 = vmatpush2.msra.mxu0 0.0
    %678 = vmatprep.subr.mxu0 0.0
    %679 = vmatpush2.msra.mxu0 0.0
    %680 = vmatprep.subr.mxu0 0.0
    %681 = vmatpush2.msra.mxu0 0.0
    %682 = vmatprep.subr.mxu0 0.0
    %683 = vmatpush2.msra.mxu0 0.0
    %684 = vmatprep.subr.mxu0 0.0
    %685 = vmatpush2.msra.mxu0 0.0
    %686 = vmatprep.subr.mxu0 0.0
    %687 = vmatpush2.msra.mxu0 0.0
    %688 = vmatprep.subr.mxu0 0.0
    %689 = vmatpush2.msra.mxu0 0.0
    %690 = vmatprep.subr.mxu0 0.0
    %691 = vmatpush2.msra.mxu0 0.0
    %692 = vmatprep.subr.mxu0 0.0
    %693 = vmatpush2.msra.mxu0 0.0
    %694 = vmatprep.subr.mxu0 0.0
    %695 = vmatpush2.msra.mxu0 0.0
    %696 = vmatprep.subr.mxu0 0.0
    %697 = vmatpush2.msra.mxu0 0.0
    %698 = vmatprep.mubr.f32.mxu0 0.0
    %699 = vmatmul.mubr.f32.gmra.mxu0 %v633
    %v700 = vpop.f32.mrf.mxu0
    %v701 = vadd.f32 0.0, %v700
    %v702 = vpop.f32.mrf.mxu0
    %v703 = vadd.f32 0.0, %v702
    %704 = vdwg.mxu0
    %705 = vmatprep.subr.mxu0 %v109
    %706 = vmatpush1.msra.mxu0 %v108
    %707 = vmatprep.subr.mxu0 %v105
    %708 = vmatpush1.msra.mxu0 %v104
    %709 = vmatprep.subr.mxu0 %v101
    %710 = vmatpush1.msra.mxu0 %v100
    %711 = vmatprep.subr.mxu0 %v97
    %712 = vmatpush1.msra.mxu0 %v96
    %713 = vmatprep.subr.mxu0 %v93
    %714 = vmatpush1.msra.mxu0 %v92
    %715 = vmatprep.subr.mxu0 %v89
    %716 = vmatpush1.msra.mxu0 %v88
    %717 = vmatprep.subr.mxu0 %v85
    %718 = vmatpush1.msra.mxu0 %v84
    %719 = vmatprep.subr.mxu0 %v81
    %720 = vmatpush1.msra.mxu0 %v80
    %721 = vmatprep.subr.mxu0 %v77
    %722 = vmatpush1.msra.mxu0 %v76
    %723 = vmatprep.subr.mxu0 %v73
    %724 = vmatpush1.msra.mxu0 %v72
    %725 = vmatprep.subr.mxu0 %v69
    %726 = vmatpush1.msra.mxu0 %v68
    %727 = vmatprep.subr.mxu0 %v65
    %728 = vmatpush1.msra.mxu0 %v64
    %729 = vmatprep.subr.mxu0 %v61
    %730 = vmatpush1.msra.mxu0 %v60
    %731 = vmatprep.subr.mxu0 %v57
    %732 = vmatpush1.msra.mxu0 %v56
    %733 = vmatprep.subr.mxu0 %v53
    %734 = vmatpush1.msra.mxu0 %v52
    %735 = vmatprep.subr.mxu0 %v49
    %736 = vmatpush1.msra.mxu0 %v48
    %737 = vmatprep.subr.mxu0 0.0
    %738 = vmatpush2.msra.mxu0 0.0
    %739 = vmatprep.subr.mxu0 0.0
    %740 = vmatpush2.msra.mxu0 0.0
    %741 = vmatprep.subr.mxu0 0.0
    %742 = vmatpush2.msra.mxu0 0.0
    %743 = vmatprep.subr.mxu0 0.0
    %744 = vmatpush2.msra.mxu0 0.0
    %745 = vmatprep.subr.mxu0 0.0
    %746 = vmatpush2.msra.mxu0 0.0
    %747 = vmatprep.subr.mxu0 0.0
    %748 = vmatpush2.msra.mxu0 0.0
    %749 = vmatprep.subr.mxu0 0.0
    %750 = vmatpush2.msra.mxu0 0.0
    %751 = vmatprep.subr.mxu0 0.0
    %752 = vmatpush2.msra.mxu0 0.0
    %753 = vmatprep.subr.mxu0 0.0
    %754 = vmatpush2.msra.mxu0 0.0
    %755 = vmatprep.subr.mxu0 0.0
    %756 = vmatpush2.msra.mxu0 0.0
    %757 = vmatprep.subr.mxu0 0.0
    %758 = vmatpush2.msra.mxu0 0.0
    %759 = vmatprep.subr.mxu0 0.0
    %760 = vmatpush2.msra.mxu0 0.0
    %761 = vmatprep.subr.mxu0 0.0
    %762 = vmatpush2.msra.mxu0 0.0
    %763 = vmatprep.subr.mxu0 0.0
    %764 = vmatpush2.msra.mxu0 0.0
    %765 = vmatprep.subr.mxu0 0.0
    %766 = vmatpush2.msra.mxu0 0.0
    %767 = vmatprep.subr.mxu0 0.0
    %768 = vmatpush2.msra.mxu0 0.0
    %769 = vmatprep.mubr.f32.mxu0 0.0
    %770 = vmatmul.mubr.f32.gmra.mxu0 %v633
    %v771 = vpop.f32.mrf.mxu0
    %v772 = vadd.f32 0.0, %v771
    %v773 = vpop.f32.mrf.mxu0
    %v774 = vadd.f32 0.0, %v773
    %775 = vdwg.mxu0
    %v776 = vadd.f32 %v629, %v701
    %v777 = vadd.f32 %v630, %v703
    %v778 = vadd.f32 %v631, %v772
    %v779 = vadd.f32 %v632, %v774
    %v780 = vmul.f32 %v776, 0.5
    %v781 = vtanh.pop %v780
    %v782 = vmul.f32 %v781, 0.5
    %v783 = vadd.f32 %v782, 0.5
    %v784 = vmul.f32 %v777, 0.5
    %v785 = vtanh.pop %v784
    %v786 = vmul.f32 %v785, 0.5
    %v787 = vadd.f32 %v786, 0.5
    %v788 = vtanh.pop %v778
    %v789 = vmul.f32 %v779, 0.5
    %v790 = vtanh.pop %v789
    %v791 = vmul.f32 %v790, 0.5
    %v792 = vadd.f32 %v791, 0.5
    %v793 = vld [vmem:[#allocation3] sm:$0xff]
    %v794 = vmul.f32 %v787, %v793
    %v795 = vmul.f32 %v783, %v788
    %v796 = vadd.f32 %v794, %v795
    %797 = vst [vmem:[#allocation3] sm:$0xff] %v796
    %v798 = vtanh.pop %v796
    %v799 = vmul.f32 %v792, %v798
    %800 = vst [vmem:[#allocation2] sm:$0xff] %v799
    %s801 = scalar_lea.vmem [#allocation4], 128
    %v802 = vld [vmem:[%s801] sm:$0xff]
    %v803 = vld [vmem:[%s801 + $0x8] sm:$0xff]
    %v804 = vld [vmem:[%s801 + $0x10] sm:$0xff]
    %v805 = vld [vmem:[%s801 + $0x18] sm:$0xff]
    %v806 = vld [vmem:[#allocation2] sm:$0xff]
    %807 = vmatprep.subr.mxu0 %v107
    %808 = vmatpush1.msra.mxu0 %v106
    %809 = vmatprep.subr.mxu0 %v103
    %810 = vmatpush1.msra.mxu0 %v102
    %811 = vmatprep.subr.mxu0 %v99
    %812 = vmatpush1.msra.mxu0 %v98
    %813 = vmatprep.subr.mxu0 %v95
    %814 = vmatpush1.msra.mxu0 %v94
    %815 = vmatprep.subr.mxu0 %v91
    %816 = vmatpush1.msra.mxu0 %v90
    %817 = vmatprep.subr.mxu0 %v87
    %818 = vmatpush1.msra.mxu0 %v86
    %819 = vmatprep.subr.mxu0 %v83
    %820 = vmatpush1.msra.mxu0 %v82
    %821 = vmatprep.subr.mxu0 %v79
    %822 = vmatpush1.msra.mxu0 %v78
    %823 = vmatprep.subr.mxu0 %v75
    %824 = vmatpush1.msra.mxu0 %v74
    %825 = vmatprep.subr.mxu0 %v71
    %826 = vmatpush1.msra.mxu0 %v70
    %827 = vmatprep.subr.mxu0 %v67
    %828 = vmatpush1.msra.mxu0 %v66
    %829 = vmatprep.subr.mxu0 %v63
    %830 = vmatpush1.msra.mxu0 %v62
    %831 = vmatprep.subr.mxu0 %v59
    %832 = vmatpush1.msra.mxu0 %v58
    %833 = vmatprep.subr.mxu0 %v55
    %834 = vmatpush1.msra.mxu0 %v54
    %835 = vmatprep.subr.mxu0 %v51
    %836 = vmatpush1.msra.mxu0 %v50
    %837 = vmatprep.subr.mxu0 %v47
    %838 = vmatpush1.msra.mxu0 %v46
    %839 = vmatprep.subr.mxu0 0.0
    %840 = vmatpush2.msra.mxu0 0.0
    %841 = vmatprep.subr.mxu0 0.0
    %842 = vmatpush2.msra.mxu0 0.0
    %843 = vmatprep.subr.mxu0 0.0
    %844 = vmatpush2.msra.mxu0 0.0
    %845 = vmatprep.subr.mxu0 0.0
    %846 = vmatpush2.msra.mxu0 0.0
    %847 = vmatprep.subr.mxu0 0.0
    %848 = vmatpush2.msra.mxu0 0.0
    %849 = vmatprep.subr.mxu0 0.0
    %850 = vmatpush2.msra.mxu0 0.0
    %851 = vmatprep.subr.mxu0 0.0
    %852 = vmatpush2.msra.mxu0 0.0
    %853 = vmatprep.subr.mxu0 0.0
    %854 = vmatpush2.msra.mxu0 0.0
    %855 = vmatprep.subr.mxu0 0.0
    %856 = vmatpush2.msra.mxu0 0.0
    %857 = vmatprep.subr.mxu0 0.0
    %858 = vmatpush2.msra.mxu0 0.0
    %859 = vmatprep.subr.mxu0 0.0
    %860 = vmatpush2.msra.mxu0 0.0
    %861 = vmatprep.subr.mxu0 0.0
    %862 = vmatpush2.msra.mxu0 0.0
    %863 = vmatprep.subr.mxu0 0.0
    %864 = vmatpush2.msra.mxu0 0.0
    %865 = vmatprep.subr.mxu0 0.0
    %866 = vmatpush2.msra.mxu0 0.0
    %867 = vmatprep.subr.mxu0 0.0
    %868 = vmatpush2.msra.mxu0 0.0
    %869 = vmatprep.subr.mxu0 0.0
    %870 = vmatpush2.msra.mxu0 0.0
    %871 = vmatprep.mubr.f32.mxu0 0.0
    %872 = vmatmul.mubr.f32.gmra.mxu0 %v806
    %v873 = vpop.f32.mrf.mxu0
    %v874 = vadd.f32 0.0, %v873
    %v875 = vpop.f32.mrf.mxu0
    %v876 = vadd.f32 0.0, %v875
    %877 = vdwg.mxu0
    %878 = vmatprep.subr.mxu0 %v109
    %879 = vmatpush1.msra.mxu0 %v108
    %880 = vmatprep.subr.mxu0 %v105
    %881 = vmatpush1.msra.mxu0 %v104
    %882 = vmatprep.subr.mxu0 %v101
    %883 = vmatpush1.msra.mxu0 %v100
    %884 = vmatprep.subr.mxu0 %v97
    %885 = vmatpush1.msra.mxu0 %v96
    %886 = vmatprep.subr.mxu0 %v93
    %887 = vmatpush1.msra.mxu0 %v92
    %888 = vmatprep.subr.mxu0 %v89
    %889 = vmatpush1.msra.mxu0 %v88
    %890 = vmatprep.subr.mxu0 %v85
    %891 = vmatpush1.msra.mxu0 %v84
    %892 = vmatprep.subr.mxu0 %v81
    %893 = vmatpush1.msra.mxu0 %v80
    %894 = vmatprep.subr.mxu0 %v77
    %895 = vmatpush1.msra.mxu0 %v76
    %896 = vmatprep.subr.mxu0 %v73
    %897 = vmatpush1.msra.mxu0 %v72
    %898 = vmatprep.subr.mxu0 %v69
    %899 = vmatpush1.msra.mxu0 %v68
    %900 = vmatprep.subr.mxu0 %v65
    %901 = vmatpush1.msra.mxu0 %v64
    %902 = vmatprep.subr.mxu0 %v61
    %903 = vmatpush1.msra.mxu0 %v60
    %904 = vmatprep.subr.mxu0 %v57
    %905 = vmatpush1.msra.mxu0 %v56
    %906 = vmatprep.subr.mxu0 %v53
    %907 = vmatpush1.msra.mxu0 %v52
    %908 = vmatprep.subr.mxu0 %v49
    %909 = vmatpush1.msra.mxu0 %v48
    %910 = vmatprep.subr.mxu0 0.0
    %911 = vmatpush2.msra.mxu0 0.0
    %912 = vmatprep.subr.mxu0 0.0
    %913 = vmatpush2.msra.mxu0 0.0
    %914 = vmatprep.subr.mxu0 0.0
    %915 = vmatpush2.msra.mxu0 0.0
    %916 = vmatprep.subr.mxu0 0.0
    %917 = vmatpush2.msra.mxu0 0.0
    %918 = vmatprep.subr.mxu0 0.0
    %919 = vmatpush2.msra.mxu0 0.0
    %920 = vmatprep.subr.mxu0 0.0
    %921 = vmatpush2.msra.mxu0 0.0
    %922 = vmatprep.subr.mxu0 0.0
    %923 = vmatpush2.msra.mxu0 0.0
    %924 = vmatprep.subr.mxu0 0.0
    %925 = vmatpush2.msra.mxu0 0.0
    %926 = vmatprep.subr.mxu0 0.0
    %927 = vmatpush2.msra.mxu0 0.0
    %928 = vmatprep.subr.mxu0 0.0
    %929 = vmatpush2.msra.mxu0 0.0
    %930 = vmatprep.subr.mxu0 0.0
    %931 = vmatpush2.msra.mxu0 0.0
    %932 = vmatprep.subr.mxu0 0.0
    %933 = vmatpush2.msra.mxu0 0.0
    %934 = vmatprep.subr.mxu0 0.0
    %935 = vmatpush2.msra.mxu0 0.0
    %936 = vmatprep.subr.mxu0 0.0
    %937 = vmatpush2.msra.mxu0 0.0
    %938 = vmatprep.subr.mxu0 0.0
    %939 = vmatpush2.msra.mxu0 0.0
    %940 = vmatprep.subr.mxu0 0.0
    %941 = vmatpush2.msra.mxu0 0.0
    %942 = vmatprep.mubr.f32.mxu0 0.0
    %943 = vmatmul.mubr.f32.gmra.mxu0 %v806
    %v944 = vpop.f32.mrf.mxu0
    %v945 = vadd.f32 0.0, %v944
    %v946 = vpop.f32.mrf.mxu0
    %v947 = vadd.f32 0.0, %v946
    %948 = vdwg.mxu0
    %v949 = vadd.f32 %v802, %v874
    %v950 = vadd.f32 %v803, %v876
    %v951 = vadd.f32 %v804, %v945
    %v952 = vadd.f32 %v805, %v947
    %v953 = vmul.f32 %v949, 0.5
    %v954 = vtanh.pop %v953
    %v955 = vmul.f32 %v954, 0.5
    %v956 = vadd.f32 %v955, 0.5
    %v957 = vmul.f32 %v950, 0.5
    %v958 = vtanh.pop %v957
    %v959 = vmul.f32 %v958, 0.5
    %v960 = vadd.f32 %v959, 0.5
    %v961 = vtanh.pop %v951
    %v962 = vmul.f32 %v952, 0.5
    %v963 = vtanh.pop %v962
    %v964 = vmul.f32 %v963, 0.5
    %v965 = vadd.f32 %v964, 0.5
    %v966 = vld [vmem:[#allocation3] sm:$0xff]
    %v967 = vmul.f32 %v960, %v966
    %v968 = vmul.f32 %v956, %v961
    %v969 = vadd.f32 %v967, %v968
    %970 = vst [vmem:[#allocation3] sm:$0xff] %v969
    %v971 = vtanh.pop %v969
    %v972 = vmul.f32 %v965, %v971
    %973 = vst [vmem:[#allocation2] sm:$0xff] %v972
    %s974 = scalar_lea.vmem [#allocation4], 160
    %v975 = vld [vmem:[%s974] sm:$0xff]
    %v976 = vld [vmem:[%s974 + $0x8] sm:$0xff]
    %v977 = vld [vmem:[%s974 + $0x10] sm:$0xff]
    %v978 = vld [vmem:[%s974 + $0x18] sm:$0xff]
    %v979 = vld [vmem:[#allocation2] sm:$0xff]
    %980 = vmatprep.subr.mxu0 %v107
    %981 = vmatpush1.msra.mxu0 %v106
    %982 = vmatprep.subr.mxu0 %v103
    %983 = vmatpush1.msra.mxu0 %v102
    %984 = vmatprep.subr.mxu0 %v99
    %985 = vmatpush1.msra.mxu0 %v98
    %986 = vmatprep.subr.mxu0 %v95
    %987 = vmatpush1.msra.mxu0 %v94
    %988 = vmatprep.subr.mxu0 %v91
    %989 = vmatpush1.msra.mxu0 %v90
    %990 = vmatprep.subr.mxu0 %v87
    %991 = vmatpush1.msra.mxu0 %v86
    %992 = vmatprep.subr.mxu0 %v83
    %993 = vmatpush1.msra.mxu0 %v82
    %994 = vmatprep.subr.mxu0 %v79
    %995 = vmatpush1.msra.mxu0 %v78
    %996 = vmatprep.subr.mxu0 %v75
    %997 = vmatpush1.msra.mxu0 %v74
    %998 = vmatprep.subr.mxu0 %v71
    %999 = vmatpush1.msra.mxu0 %v70
    %1000 = vmatprep.subr.mxu0 %v67
    %1001 = vmatpush1.msra.mxu0 %v66
    %1002 = vmatprep.subr.mxu0 %v63
    %1003 = vmatpush1.msra.mxu0 %v62
    %1004 = vmatprep.subr.mxu0 %v59
    %1005 = vmatpush1.msra.mxu0 %v58
    %1006 = vmatprep.subr.mxu0 %v55
    %1007 = vmatpush1.msra.mxu0 %v54
    %1008 = vmatprep.subr.mxu0 %v51
    %1009 = vmatpush1.msra.mxu0 %v50
    %1010 = vmatprep.subr.mxu0 %v47
    %1011 = vmatpush1.msra.mxu0 %v46
    %1012 = vmatprep.subr.mxu0 0.0
    %1013 = vmatpush2.msra.mxu0 0.0
    %1014 = vmatprep.subr.mxu0 0.0
    %1015 = vmatpush2.msra.mxu0 0.0
    %1016 = vmatprep.subr.mxu0 0.0
    %1017 = vmatpush2.msra.mxu0 0.0
    %1018 = vmatprep.subr.mxu0 0.0
    %1019 = vmatpush2.msra.mxu0 0.0
    %1020 = vmatprep.subr.mxu0 0.0
    %1021 = vmatpush2.msra.mxu0 0.0
    %1022 = vmatprep.subr.mxu0 0.0
    %1023 = vmatpush2.msra.mxu0 0.0
    %1024 = vmatprep.subr.mxu0 0.0
    %1025 = vmatpush2.msra.mxu0 0.0
    %1026 = vmatprep.subr.mxu0 0.0
    %1027 = vmatpush2.msra.mxu0 0.0
    %1028 = vmatprep.subr.mxu0 0.0
    %1029 = vmatpush2.msra.mxu0 0.0
    %1030 = vmatprep.subr.mxu0 0.0
    %1031 = vmatpush2.msra.mxu0 0.0
    %1032 = vmatprep.subr.mxu0 0.0
    %1033 = vmatpush2.msra.mxu0 0.0
    %1034 = vmatprep.subr.mxu0 0.0
    %1035 = vmatpush2.msra.mxu0 0.0
    %1036 = vmatprep.subr.mxu0 0.0
    %1037 = vmatpush2.msra.mxu0 0.0
    %1038 = vmatprep.subr.mxu0 0.0
    %1039 = vmatpush2.msra.mxu0 0.0
    %1040 = vmatprep.subr.mxu0 0.0
    %1041 = vmatpush2.msra.mxu0 0.0
    %1042 = vmatprep.subr.mxu0 0.0
    %1043 = vmatpush2.msra.mxu0 0.0
    %1044 = vmatprep.mubr.f32.mxu0 0.0
    %1045 = vmatmul.mubr.f32.gmra.mxu0 %v979
    %v1046 = vpop.f32.mrf.mxu0
    %v1047 = vadd.f32 0.0, %v1046
    %v1048 = vpop.f32.mrf.mxu0
    %v1049 = vadd.f32 0.0, %v1048
    %1050 = vdwg.mxu0
    %1051 = vmatprep.subr.mxu0 %v109
    %1052 = vmatpush1.msra.mxu0 %v108
    %1053 = vmatprep.subr.mxu0 %v105
    %1054 = vmatpush1.msra.mxu0 %v104
    %1055 = vmatprep.subr.mxu0 %v101
    %1056 = vmatpush1.msra.mxu0 %v100
    %1057 = vmatprep.subr.mxu0 %v97
    %1058 = vmatpush1.msra.mxu0 %v96
    %1059 = vmatprep.subr.mxu0 %v93
    %1060 = vmatpush1.msra.mxu0 %v92
    %1061 = vmatprep.subr.mxu0 %v89
    %1062 = vmatpush1.msra.mxu0 %v88
    %1063 = vmatprep.subr.mxu0 %v85
    %1064 = vmatpush1.msra.mxu0 %v84
    %1065 = vmatprep.subr.mxu0 %v81
    %1066 = vmatpush1.msra.mxu0 %v80
    %1067 = vmatprep.subr.mxu0 %v77
    %1068 = vmatpush1.msra.mxu0 %v76
    %1069 = vmatprep.subr.mxu0 %v73
    %1070 = vmatpush1.msra.mxu0 %v72
    %1071 = vmatprep.subr.mxu0 %v69
    %1072 = vmatpush1.msra.mxu0 %v68
    %1073 = vmatprep.subr.mxu0 %v65
    %1074 = vmatpush1.msra.mxu0 %v64
    %1075 = vmatprep.subr.mxu0 %v61
    %1076 = vmatpush1.msra.mxu0 %v60
    %1077 = vmatprep.subr.mxu0 %v57
    %1078 = vmatpush1.msra.mxu0 %v56
    %1079 = vmatprep.subr.mxu0 %v53
    %1080 = vmatpush1.msra.mxu0 %v52
    %1081 = vmatprep.subr.mxu0 %v49
    %1082 = vmatpush1.msra.mxu0 %v48
    %1083 = vmatprep.subr.mxu0 0.0
    %1084 = vmatpush2.msra.mxu0 0.0
    %1085 = vmatprep.subr.mxu0 0.0
    %1086 = vmatpush2.msra.mxu0 0.0
    %1087 = vmatprep.subr.mxu0 0.0
    %1088 = vmatpush2.msra.mxu0 0.0
    %1089 = vmatprep.subr.mxu0 0.0
    %1090 = vmatpush2.msra.mxu0 0.0
    %1091 = vmatprep.subr.mxu0 0.0
    %1092 = vmatpush2.msra.mxu0 0.0
    %1093 = vmatprep.subr.mxu0 0.0
    %1094 = vmatpush2.msra.mxu0 0.0
    %1095 = vmatprep.subr.mxu0 0.0
    %1096 = vmatpush2.msra.mxu0 0.0
    %1097 = vmatprep.subr.mxu0 0.0
    %1098 = vmatpush2.msra.mxu0 0.0
    %1099 = vmatprep.subr.mxu0 0.0
    %1100 = vmatpush2.msra.mxu0 0.0
    %1101 = vmatprep.subr.mxu0 0.0
    %1102 = vmatpush2.msra.mxu0 0.0
    %1103 = vmatprep.subr.mxu0 0.0
    %1104 = vmatpush2.msra.mxu0 0.0
    %1105 = vmatprep.subr.mxu0 0.0
    %1106 = vmatpush2.msra.mxu0 0.0
    %1107 = vmatprep.subr.mxu0 0.0
    %1108 = vmatpush2.msra.mxu0 0.0
    %1109 = vmatprep.subr.mxu0 0.0
    %1110 = vmatpush2.msra.mxu0 0.0
    %1111 = vmatprep.subr.mxu0 0.0
    %1112 = vmatpush2.msra.mxu0 0.0
    %1113 = vmatprep.subr.mxu0 0.0
    %1114 = vmatpush2.msra.mxu0 0.0
    %1115 = vmatprep.mubr.f32.mxu0 0.0
    %1116 = vmatmul.mubr.f32.gmra.mxu0 %v979
    %v1117 = vpop.f32.mrf.mxu0
    %v1118 = vadd.f32 0.0, %v1117
    %v1119 = vpop.f32.mrf.mxu0
    %v1120 = vadd.f32 0.0, %v1119
    %1121 = vdwg.mxu0
    %v1122 = vadd.f32 %v975, %v1047
    %v1123 = vadd.f32 %v976, %v1049
    %v1124 = vadd.f32 %v977, %v1118
    %v1125 = vadd.f32 %v978, %v1120
    %v1126 = vmul.f32 %v1122, 0.5
    %v1127 = vtanh.pop %v1126
    %v1128 = vmul.f32 %v1127, 0.5
    %v1129 = vadd.f32 %v1128, 0.5
    %v1130 = vmul.f32 %v1123, 0.5
    %v1131 = vtanh.pop %v1130
    %v1132 = vmul.f32 %v1131, 0.5
    %v1133 = vadd.f32 %v1132, 0.5
    %v1134 = vtanh.pop %v1124
    %v1135 = vmul.f32 %v1125, 0.5
    %v1136 = vtanh.pop %v1135
    %v1137 = vmul.f32 %v1136, 0.5
    %v1138 = vadd.f32 %v1137, 0.5
    %v1139 = vld [vmem:[#allocation3] sm:$0xff]
    %v1140 = vmul.f32 %v1133, %v1139
    %v1141 = vmul.f32 %v1129, %v1134
    %v1142 = vadd.f32 %v1140, %v1141
    %1143 = vst [vmem:[#allocation3] sm:$0xff] %v1142
    %v1144 = vtanh.pop %v1142
    %v1145 = vmul.f32 %v1138, %v1144
    %1146 = vst [vmem:[#allocation2] sm:$0xff] %v1145
    %s1147 = scalar_lea.vmem [#allocation4], 192
    %v1148 = vld [vmem:[%s1147] sm:$0xff]
    %v1149 = vld [vmem:[%s1147 + $0x8] sm:$0xff]
    %v1150 = vld [vmem:[%s1147 + $0x10] sm:$0xff]
    %v1151 = vld [vmem:[%s1147 + $0x18] sm:$0xff]
    %v1152 = vld [vmem:[#allocation2] sm:$0xff]
    %1153 = vmatprep.subr.mxu0 %v107
    %1154 = vmatpush1.msra.mxu0 %v106
    %1155 = vmatprep.subr.mxu0 %v103
    %1156 = vmatpush1.msra.mxu0 %v102
    %1157 = vmatprep.subr.mxu0 %v99
    %1158 = vmatpush1.msra.mxu0 %v98
    %1159 = vmatprep.subr.mxu0 %v95
    %1160 = vmatpush1.msra.mxu0 %v94
    %1161 = vmatprep.subr.mxu0 %v91
    %1162 = vmatpush1.msra.mxu0 %v90
    %1163 = vmatprep.subr.mxu0 %v87
    %1164 = vmatpush1.msra.mxu0 %v86
    %1165 = vmatprep.subr.mxu0 %v83
    %1166 = vmatpush1.msra.mxu0 %v82
    %1167 = vmatprep.subr.mxu0 %v79
    %1168 = vmatpush1.msra.mxu0 %v78
    %1169 = vmatprep.subr.mxu0 %v75
    %1170 = vmatpush1.msra.mxu0 %v74
    %1171 = vmatprep.subr.mxu0 %v71
    %1172 = vmatpush1.msra.mxu0 %v70
    %1173 = vmatprep.subr.mxu0 %v67
    %1174 = vmatpush1.msra.mxu0 %v66
    %1175 = vmatprep.subr.mxu0 %v63
    %1176 = vmatpush1.msra.mxu0 %v62
    %1177 = vmatprep.subr.mxu0 %v59
    %1178 = vmatpush1.msra.mxu0 %v58
    %1179 = vmatprep.subr.mxu0 %v55
    %1180 = vmatpush1.msra.mxu0 %v54
    %1181 = vmatprep.subr.mxu0 %v51
    %1182 = vmatpush1.msra.mxu0 %v50
    %1183 = vmatprep.subr.mxu0 %v47
    %1184 = vmatpush1.msra.mxu0 %v46
    %1185 = vmatprep.subr.mxu0 0.0
    %1186 = vmatpush2.msra.mxu0 0.0
    %1187 = vmatprep.subr.mxu0 0.0
    %1188 = vmatpush2.msra.mxu0 0.0
    %1189 = vmatprep.subr.mxu0 0.0
    %1190 = vmatpush2.msra.mxu0 0.0
    %1191 = vmatprep.subr.mxu0 0.0
    %1192 = vmatpush2.msra.mxu0 0.0
    %1193 = vmatprep.subr.mxu0 0.0
    %1194 = vmatpush2.msra.mxu0 0.0
    %1195 = vmatprep.subr.mxu0 0.0
    %1196 = vmatpush2.msra.mxu0 0.0
    %1197 = vmatprep.subr.mxu0 0.0
    %1198 = vmatpush2.msra.mxu0 0.0
    %1199 = vmatprep.subr.mxu0 0.0
    %1200 = vmatpush2.msra.mxu0 0.0
    %1201 = vmatprep.subr.mxu0 0.0
    %1202 = vmatpush2.msra.mxu0 0.0
    %1203 = vmatprep.subr.mxu0 0.0
    %1204 = vmatpush2.msra.mxu0 0.0
    %1205 = vmatprep.subr.mxu0 0.0
    %1206 = vmatpush2.msra.mxu0 0.0
    %1207 = vmatprep.subr.mxu0 0.0
    %1208 = vmatpush2.msra.mxu0 0.0
    %1209 = vmatprep.subr.mxu0 0.0
    %1210 = vmatpush2.msra.mxu0 0.0
    %1211 = vmatprep.subr.mxu0 0.0
    %1212 = vmatpush2.msra.mxu0 0.0
    %1213 = vmatprep.subr.mxu0 0.0
    %1214 = vmatpush2.msra.mxu0 0.0
    %1215 = vmatprep.subr.mxu0 0.0
    %1216 = vmatpush2.msra.mxu0 0.0
    %1217 = vmatprep.mubr.f32.mxu0 0.0
    %1218 = vmatmul.mubr.f32.gmra.mxu0 %v1152
    %v1219 = vpop.f32.mrf.mxu0
    %v1220 = vadd.f32 0.0, %v1219
    %v1221 = vpop.f32.mrf.mxu0
    %v1222 = vadd.f32 0.0, %v1221
    %1223 = vdwg.mxu0
    %1224 = vmatprep.subr.mxu0 %v109
    %1225 = vmatpush1.msra.mxu0 %v108
    %1226 = vmatprep.subr.mxu0 %v105
    %1227 = vmatpush1.msra.mxu0 %v104
    %1228 = vmatprep.subr.mxu0 %v101
    %1229 = vmatpush1.msra.mxu0 %v100
    %1230 = vmatprep.subr.mxu0 %v97
    %1231 = vmatpush1.msra.mxu0 %v96
    %1232 = vmatprep.subr.mxu0 %v93
    %1233 = vmatpush1.msra.mxu0 %v92
    %1234 = vmatprep.subr.mxu0 %v89
    %1235 = vmatpush1.msra.mxu0 %v88
    %1236 = vmatprep.subr.mxu0 %v85
    %1237 = vmatpush1.msra.mxu0 %v84
    %1238 = vmatprep.subr.mxu0 %v81
    %1239 = vmatpush1.msra.mxu0 %v80
    %1240 = vmatprep.subr.mxu0 %v77
    %1241 = vmatpush1.msra.mxu0 %v76
    %1242 = vmatprep.subr.mxu0 %v73
    %1243 = vmatpush1.msra.mxu0 %v72
    %1244 = vmatprep.subr.mxu0 %v69
    %1245 = vmatpush1.msra.mxu0 %v68
    %1246 = vmatprep.subr.mxu0 %v65
    %1247 = vmatpush1.msra.mxu0 %v64
    %1248 = vmatprep.subr.mxu0 %v61
    %1249 = vmatpush1.msra.mxu0 %v60
    %1250 = vmatprep.subr.mxu0 %v57
    %1251 = vmatpush1.msra.mxu0 %v56
    %1252 = vmatprep.subr.mxu0 %v53
    %1253 = vmatpush1.msra.mxu0 %v52
    %1254 = vmatprep.subr.mxu0 %v49
    %1255 = vmatpush1.msra.mxu0 %v48
    %1256 = vmatprep.subr.mxu0 0.0
    %1257 = vmatpush2.msra.mxu0 0.0
    %1258 = vmatprep.subr.mxu0 0.0
    %1259 = vmatpush2.msra.mxu0 0.0
    %1260 = vmatprep.subr.mxu0 0.0
    %1261 = vmatpush2.msra.mxu0 0.0
    %1262 = vmatprep.subr.mxu0 0.0
    %1263 = vmatpush2.msra.mxu0 0.0
    %1264 = vmatprep.subr.mxu0 0.0
    %1265 = vmatpush2.msra.mxu0 0.0
    %1266 = vmatprep.subr.mxu0 0.0
    %1267 = vmatpush2.msra.mxu0 0.0
    %1268 = vmatprep.subr.mxu0 0.0
    %1269 = vmatpush2.msra.mxu0 0.0
    %1270 = vmatprep.subr.mxu0 0.0
    %1271 = vmatpush2.msra.mxu0 0.0
    %1272 = vmatprep.subr.mxu0 0.0
    %1273 = vmatpush2.msra.mxu0 0.0
    %1274 = vmatprep.subr.mxu0 0.0
    %1275 = vmatpush2.msra.mxu0 0.0
    %1276 = vmatprep.subr.mxu0 0.0
    %1277 = vmatpush2.msra.mxu0 0.0
    %1278 = vmatprep.subr.mxu0 0.0
    %1279 = vmatpush2.msra.mxu0 0.0
    %1280 = vmatprep.subr.mxu0 0.0
    %1281 = vmatpush2.msra.mxu0 0.0
    %1282 = vmatprep.subr.mxu0 0.0
    %1283 = vmatpush2.msra.mxu0 0.0
    %1284 = vmatprep.subr.mxu0 0.0
    %1285 = vmatpush2.msra.mxu0 0.0
    %1286 = vmatprep.subr.mxu0 0.0
    %1287 = vmatpush2.msra.mxu0 0.0
    %1288 = vmatprep.mubr.f32.mxu0 0.0
    %1289 = vmatmul.mubr.f32.gmra.mxu0 %v1152
    %v1290 = vpop.f32.mrf.mxu0
    %v1291 = vadd.f32 0.0, %v1290
    %v1292 = vpop.f32.mrf.mxu0
    %v1293 = vadd.f32 0.0, %v1292
    %1294 = vdwg.mxu0
    %v1295 = vadd.f32 %v1148, %v1220
    %v1296 = vadd.f32 %v1149, %v1222
    %v1297 = vadd.f32 %v1150, %v1291
    %v1298 = vadd.f32 %v1151, %v1293
    %v1299 = vmul.f32 %v1295, 0.5
    %v1300 = vtanh.pop %v1299
    %v1301 = vmul.f32 %v1300, 0.5
    %v1302 = vadd.f32 %v1301, 0.5
    %v1303 = vmul.f32 %v1296, 0.5
    %v1304 = vtanh.pop %v1303
    %v1305 = vmul.f32 %v1304, 0.5
    %v1306 = vadd.f32 %v1305, 0.5
    %v1307 = vtanh.pop %v1297
    %v1308 = vmul.f32 %v1298, 0.5
    %v1309 = vtanh.pop %v1308
    %v1310 = vmul.f32 %v1309, 0.5
    %v1311 = vadd.f32 %v1310, 0.5
    %v1312 = vld [vmem:[#allocation3] sm:$0xff]
    %v1313 = vmul.f32 %v1306, %v1312
    %v1314 = vmul.f32 %v1302, %v1307
    %v1315 = vadd.f32 %v1313, %v1314
    %1316 = vst [vmem:[#allocation3] sm:$0xff] %v1315
    %v1317 = vtanh.pop %v1315
    %v1318 = vmul.f32 %v1311, %v1317
    %1319 = vst [vmem:[#allocation2] sm:$0xff] %v1318
    %s1320 = scalar_lea.vmem [#allocation4], 224
    %v1321 = vld [vmem:[%s1320] sm:$0xff]
    %v1322 = vld [vmem:[%s1320 + $0x8] sm:$0xff]
    %v1323 = vld [vmem:[%s1320 + $0x10] sm:$0xff]
    %v1324 = vld [vmem:[%s1320 + $0x18] sm:$0xff]
    %v1325 = vld [vmem:[#allocation2] sm:$0xff]
    %1326 = vmatprep.subr.mxu0 %v107
    %1327 = vmatpush1.msra.mxu0 %v106
    %1328 = vmatprep.subr.mxu0 %v103
    %1329 = vmatpush1.msra.mxu0 %v102
    %1330 = vmatprep.subr.mxu0 %v99
    %1331 = vmatpush1.msra.mxu0 %v98
    %1332 = vmatprep.subr.mxu0 %v95
    %1333 = vmatpush1.msra.mxu0 %v94
    %1334 = vmatprep.subr.mxu0 %v91
    %1335 = vmatpush1.msra.mxu0 %v90
    %1336 = vmatprep.subr.mxu0 %v87
    %1337 = vmatpush1.msra.mxu0 %v86
    %1338 = vmatprep.subr.mxu0 %v83
    %1339 = vmatpush1.msra.mxu0 %v82
    %1340 = vmatprep.subr.mxu0 %v79
    %1341 = vmatpush1.msra.mxu0 %v78
    %1342 = vmatprep.subr.mxu0 %v75
    %1343 = vmatpush1.msra.mxu0 %v74
    %1344 = vmatprep.subr.mxu0 %v71
    %1345 = vmatpush1.msra.mxu0 %v70
    %1346 = vmatprep.subr.mxu0 %v67
    %1347 = vmatpush1.msra.mxu0 %v66
    %1348 = vmatprep.subr.mxu0 %v63
    %1349 = vmatpush1.msra.mxu0 %v62
    %1350 = vmatprep.subr.mxu0 %v59
    %1351 = vmatpush1.msra.mxu0 %v58
    %1352 = vmatprep.subr.mxu0 %v55
    %1353 = vmatpush1.msra.mxu0 %v54
    %1354 = vmatprep.subr.mxu0 %v51
    %1355 = vmatpush1.msra.mxu0 %v50
    %1356 = vmatprep.subr.mxu0 %v47
    %1357 = vmatpush1.msra.mxu0 %v46
    %1358 = vmatprep.subr.mxu0 0.0
    %1359 = vmatpush2.msra.mxu0 0.0
    %1360 = vmatprep.subr.mxu0 0.0
    %1361 = vmatpush2.msra.mxu0 0.0
    %1362 = vmatprep.subr.mxu0 0.0
    %1363 = vmatpush2.msra.mxu0 0.0
    %1364 = vmatprep.subr.mxu0 0.0
    %1365 = vmatpush2.msra.mxu0 0.0
    %1366 = vmatprep.subr.mxu0 0.0
    %1367 = vmatpush2.msra.mxu0 0.0
    %1368 = vmatprep.subr.mxu0 0.0
    %1369 = vmatpush2.msra.mxu0 0.0
    %1370 = vmatprep.subr.mxu0 0.0
    %1371 = vmatpush2.msra.mxu0 0.0
    %1372 = vmatprep.subr.mxu0 0.0
    %1373 = vmatpush2.msra.mxu0 0.0
    %1374 = vmatprep.subr.mxu0 0.0
    %1375 = vmatpush2.msra.mxu0 0.0
    %1376 = vmatprep.subr.mxu0 0.0
    %1377 = vmatpush2.msra.mxu0 0.0
    %1378 = vmatprep.subr.mxu0 0.0
    %1379 = vmatpush2.msra.mxu0 0.0
    %1380 = vmatprep.subr.mxu0 0.0
    %1381 = vmatpush2.msra.mxu0 0.0
    %1382 = vmatprep.subr.mxu0 0.0
    %1383 = vmatpush2.msra.mxu0 0.0
    %1384 = vmatprep.subr.mxu0 0.0
    %1385 = vmatpush2.msra.mxu0 0.0
    %1386 = vmatprep.subr.mxu0 0.0
    %1387 = vmatpush2.msra.mxu0 0.0
    %1388 = vmatprep.subr.mxu0 0.0
    %1389 = vmatpush2.msra.mxu0 0.0
    %1390 = vmatprep.mubr.f32.mxu0 0.0
    %1391 = vmatmul.mubr.f32.gmra.mxu0 %v1325
    %v1392 = vpop.f32.mrf.mxu0
    %v1393 = vadd.f32 0.0, %v1392
    %v1394 = vpop.f32.mrf.mxu0
    %v1395 = vadd.f32 0.0, %v1394
    %1396 = vdwg.mxu0
    %1397 = vmatprep.subr.mxu0 %v109
    %1398 = vmatpush1.msra.mxu0 %v108
    %1399 = vmatprep.subr.mxu0 %v105
    %1400 = vmatpush1.msra.mxu0 %v104
    %1401 = vmatprep.subr.mxu0 %v101
    %1402 = vmatpush1.msra.mxu0 %v100
    %1403 = vmatprep.subr.mxu0 %v97
    %1404 = vmatpush1.msra.mxu0 %v96
    %1405 = vmatprep.subr.mxu0 %v93
    %1406 = vmatpush1.msra.mxu0 %v92
    %1407 = vmatprep.subr.mxu0 %v89
    %1408 = vmatpush1.msra.mxu0 %v88
    %1409 = vmatprep.subr.mxu0 %v85
    %1410 = vmatpush1.msra.mxu0 %v84
    %1411 = vmatprep.subr.mxu0 %v81
    %1412 = vmatpush1.msra.mxu0 %v80
    %1413 = vmatprep.subr.mxu0 %v77
    %1414 = vmatpush1.msra.mxu0 %v76
    %1415 = vmatprep.subr.mxu0 %v73
    %1416 = vmatpush1.msra.mxu0 %v72
    %1417 = vmatprep.subr.mxu0 %v69
    %1418 = vmatpush1.msra.mxu0 %v68
    %1419 = vmatprep.subr.mxu0 %v65
    %1420 = vmatpush1.msra.mxu0 %v64
    %1421 = vmatprep.subr.mxu0 %v61
    %1422 = vmatpush1.msra.mxu0 %v60
    %1423 = vmatprep.subr.mxu0 %v57
    %1424 = vmatpush1.msra.mxu0 %v56
    %1425 = vmatprep.subr.mxu0 %v53
    %1426 = vmatpush1.msra.mxu0 %v52
    %1427 = vmatprep.subr.mxu0 %v49
    %1428 = vmatpush1.msra.mxu0 %v48
    %1429 = vmatprep.subr.mxu0 0.0
    %1430 = vmatpush2.msra.mxu0 0.0
    %1431 = vmatprep.subr.mxu0 0.0
    %1432 = vmatpush2.msra.mxu0 0.0
    %1433 = vmatprep.subr.mxu0 0.0
    %1434 = vmatpush2.msra.mxu0 0.0
    %1435 = vmatprep.subr.mxu0 0.0
    %1436 = vmatpush2.msra.mxu0 0.0
    %1437 = vmatprep.subr.mxu0 0.0
    %1438 = vmatpush2.msra.mxu0 0.0
    %1439 = vmatprep.subr.mxu0 0.0
    %1440 = vmatpush2.msra.mxu0 0.0
    %1441 = vmatprep.subr.mxu0 0.0
    %1442 = vmatpush2.msra.mxu0 0.0
    %1443 = vmatprep.subr.mxu0 0.0
    %1444 = vmatpush2.msra.mxu0 0.0
    %1445 = vmatprep.subr.mxu0 0.0
    %1446 = vmatpush2.msra.mxu0 0.0
    %1447 = vmatprep.subr.mxu0 0.0
    %1448 = vmatpush2.msra.mxu0 0.0
    %1449 = vmatprep.subr.mxu0 0.0
    %1450 = vmatpush2.msra.mxu0 0.0
    %1451 = vmatprep.subr.mxu0 0.0
    %1452 = vmatpush2.msra.mxu0 0.0
    %1453 = vmatprep.subr.mxu0 0.0
    %1454 = vmatpush2.msra.mxu0 0.0
    %1455 = vmatprep.subr.mxu0 0.0
    %1456 = vmatpush2.msra.mxu0 0.0
    %1457 = vmatprep.subr.mxu0 0.0
    %1458 = vmatpush2.msra.mxu0 0.0
    %1459 = vmatprep.subr.mxu0 0.0
    %1460 = vmatpush2.msra.mxu0 0.0
    %1461 = vmatprep.mubr.f32.mxu0 0.0
    %1462 = vmatmul.mubr.f32.gmra.mxu0 %v1325
    %v1463 = vpop.f32.mrf.mxu0
    %v1464 = vadd.f32 0.0, %v1463
    %v1465 = vpop.f32.mrf.mxu0
    %v1466 = vadd.f32 0.0, %v1465
    %1467 = vdwg.mxu0
    %v1468 = vadd.f32 %v1321, %v1393
    %v1469 = vadd.f32 %v1322, %v1395
    %v1470 = vadd.f32 %v1323, %v1464
    %v1471 = vadd.f32 %v1324, %v1466
    %v1472 = vmul.f32 %v1468, 0.5
    %v1473 = vtanh.pop %v1472
    %v1474 = vmul.f32 %v1473, 0.5
    %v1475 = vadd.f32 %v1474, 0.5
    %v1476 = vmul.f32 %v1469, 0.5
    %v1477 = vtanh.pop %v1476
    %v1478 = vmul.f32 %v1477, 0.5
    %v1479 = vadd.f32 %v1478, 0.5
    %v1480 = vtanh.pop %v1470
    %v1481 = vmul.f32 %v1471, 0.5
    %v1482 = vtanh.pop %v1481
    %v1483 = vmul.f32 %v1482, 0.5
    %v1484 = vadd.f32 %v1483, 0.5
    %v1485 = vld [vmem:[#allocation3] sm:$0xff]
    %v1486 = vmul.f32 %v1479, %v1485
    %v1487 = vmul.f32 %v1475, %v1480
    %v1488 = vadd.f32 %v1486, %v1487
    %1489 = vst [vmem:[#allocation3] sm:$0xff] %v1488
    %v1490 = vtanh.pop %v1488
    %v1491 = vmul.f32 %v1484, %v1490
    %1492 = vst [vmem:[#allocation2] sm:$0xff] %v1491
    // Predicated region
    $region22: #{tpu_custom_call.1} parent=1 // pred_check
      %p1493 = pneg %p40
    $region23: #{tpu_custom_call.1} parent=1 // pred_check_branch
      %1495 = sbr.rel (%p1493) target = $region25
    $region24: #{tpu_custom_call.1} parent=1 // pred_region
      %v1496 = vld [vmem:[#allocation2] sm:$0xff]
      %1497 = vst [vmem:[#allocation9] sm:$0xff] %v1496
    $region25: #{tpu_custom_call.1} parent=1 // pred_fallthru
      _
    // Predicated region
    $region26: #{tpu_custom_call.1} parent=1 // pred_check
      _
    $region27: #{tpu_custom_call.1} parent=1 // pred_check_branch
      %1499 = sbr.rel (0) target = $region29
    $region28: #{tpu_custom_call.1} parent=1 // pred_region
      %s1501 = ssub.s32 128, 128
      %1502 = vsyncadd [#allocation6], %s1501
      %s1504 = sshll.u32 [#allocation9], 4
      %s1505 = int_to_ptr.vmem [resolvable:$true] %s1504
      %1507 = dma.vmem_to_hbm [thread:$0]  %s1505, 128, %s2, [#allocation6]
    $region29: #{tpu_custom_call.1} parent=1 // pred_fallthru
      _
    // Predicated region
    $region30: #{tpu_custom_call.1} parent=1 // pred_check
      _
    $region31: #{tpu_custom_call.1} parent=1 // pred_check_branch
      %1509 = sbr.rel (0) target = $region33
    $region32: #{tpu_custom_call.1} parent=1 // pred_region
      %1510 = dma.done [#allocation6], 128
    $region33: #{tpu_custom_call.1} parent=1 // pred_fallthru
      _
    %1511 = vsyncpa [#allocation5], 1
    %1512 = vsyncpa [#allocation8], 1
    %1513 = vsyncpa [#allocation6], 1

</llo_original>
